<compile_context>
chip_gen: v6e
topology: v6e:2x2x1
jax: 0.10.0
libtpu: 0.0.40
codegen_flags: <defaults>
</compile_context>

<pallas_src>
import functools

import jax
import jax.numpy as jnp
from jax.experimental import pallas as pl
from jax.experimental.pallas import tpu as pltpu

LANE = 128     # lane width -> hidden/gate dims padded to a multiple of this
SUBLANE = 8    # sublane tile -> batch padded to a multiple of this


def lstm_predictor_kernel(x_ref, wih_ref, whh_ref, b_ref, wout_ref, bout_ref,
                          out_ref, xp_ref, *, t_steps, bp, hp):
    # One-shot input projection for every timestep (single MXU push) with the
    # bias broadcast folded in once.  Stored to VMEM scratch so the unrolled
    # recurrence only keeps one (Bp, 4Hp) tile live per step.
    xp_ref[...] = (jnp.dot(x_ref[...], wih_ref[...],
                           preferred_element_type=jnp.float32) + b_ref[...])

    h = jnp.zeros((bp, hp), jnp.float32)
    c = jnp.zeros((bp, hp), jnp.float32)

    # Fully static, unrolled recurrence (T is small & static).
    for t in range(t_steps):
        # Load whh per use (don't pin the big weight value across the loop);
        # bf16 operands, f32 accumulation -> same numerics as DEFAULT f32 dot.
        rec = jnp.dot(h.astype(jnp.bfloat16), whh_ref[...],
                      preferred_element_type=jnp.float32)       # (Bp, 4Hp)
        gates = xp_ref[pl.ds(t * bp, bp), :] + rec               # aligned slab

        # Gate order matches PyTorch (i, f, g, o); slices are 128-lane aligned
        # thanks to Hp padding.  Fuse sigmoid over the contiguous i|f block.
        if_g = jax.nn.sigmoid(gates[:, 0 * hp:2 * hp])
        i_g = if_g[:, 0 * hp:1 * hp]
        f_g = if_g[:, 1 * hp:2 * hp]
        g_g = jnp.tanh(gates[:, 2 * hp:3 * hp])
        o_g = jax.nn.sigmoid(gates[:, 3 * hp:4 * hp])

        c = f_g * c + i_g * g_g
        h = o_g * jnp.tanh(c)

    # Fused final Linear on the last hidden state (f32).
    # TODO(synk): if the output dim grows, pad it to a multiple of 128 for an
    # unmasked lane-dense store and slice in the wrapper.
    out_ref[...] = (jnp.dot(h, wout_ref[...],
                            preferred_element_type=jnp.float32)
                    + bout_ref[...]).astype(out_ref.dtype)


def prepare_params(w_ih, w_hh, b_ih, b_hh, w_out, b_out):
    """One-time (out-of-hot-path) padding/transposition of LSTM+Linear weights.

    Invariant: padded gate channels are zero in BOTH rows and columns of every
    gate block and in the bias, so padded h/c lanes stay exactly 0 and the
    numerics match the unpadded model.
    """
    H = w_hh.shape[1]
    I = w_ih.shape[1]
    O = w_out.shape[0]
    Hp = max(LANE, ((H + LANE - 1) // LANE) * LANE)
    f32 = jnp.float32

    wih_p = jnp.zeros((4, Hp, I), f32).at[:, :H, :].set(
        w_ih.astype(f32).reshape(4, H, I))
    wih_t = wih_p.reshape(4 * Hp, I).T                          # (I, 4Hp) f32

    whh_p = jnp.zeros((4, Hp, Hp), f32).at[:, :H, :H].set(
        w_hh.astype(f32).reshape(4, H, H))
    whh_t = whh_p.reshape(4 * Hp, Hp).T.astype(jnp.bfloat16)    # (Hp, 4Hp) bf16

    b_p = jnp.zeros((4, Hp), f32).at[:, :H].set(
        (b_ih + b_hh).astype(f32).reshape(4, H)).reshape(1, 4 * Hp)

    wout_t = jnp.zeros((O, Hp), f32).at[:, :H].set(w_out.astype(f32)).T  # (Hp, O)
    bout = b_out.astype(f32).reshape(1, O)

    return wih_t, whh_t, b_p, wout_t, bout


@jax.jit
def predictor_forward(inputs, wih_t, whh_t, b_p, wout_t, bout):
    """inputs: (B, T, I) batch-first, like PyTorch nn.LSTM(batch_first=True).

    Weight args must come from `prepare_params` (already padded / transposed).
    """
    B, T, I = inputs.shape
    Hp = whh_t.shape[0]
    O = wout_t.shape[1]
    Bp = max(SUBLANE, ((B + SUBLANE - 1) // SUBLANE) * SUBLANE)
    f32 = jnp.float32

    # Time-major, batch zero-padded to a full sublane tile; flattened so the
    # whole input projection is one matmul and each step's rows are one
    # aligned (8, 4Hp) slab.  Padded rows get bias-only dynamics and are
    # dropped from the output below.
    x_tm = jnp.zeros((T, Bp, I), f32).at[:, :B, :].set(
        jnp.transpose(inputs, (1, 0, 2)).astype(f32))
    x2d = x_tm.reshape(T * Bp, I)

    kernel = functools.partial(lstm_predictor_kernel, t_steps=T, bp=Bp, hp=Hp)
    vmem = lambda: pl.BlockSpec(memory_space=pltpu.MemorySpace.VMEM)

    out_p = pl.pallas_call(
        kernel,
        out_shape=jax.ShapeDtypeStruct((Bp, O), jnp.float32),
        in_specs=[vmem() for _ in range(6)],
        out_specs=vmem(),
        scratch_shapes=[pltpu.VMEM((T * Bp, 4 * Hp), jnp.float32)],
    )(x2d, wih_t, whh_t, b_p, wout_t, bout)

    return out_p[:B]


def reference_forward(inputs, w_ih, w_hh, b_ih, b_hh, w_out, b_out):
    """Pure-JAX reference mirroring PyTorch LSTM + Linear semantics."""
    B, T, _ = inputs.shape
    H = w_hh.shape[1]
    h = jnp.zeros((B, H), jnp.float32)
    c = jnp.zeros((B, H), jnp.float32)
    for t in range(T):
        x_t = inputs[:, t, :].astype(jnp.float32)
        gates = x_t @ w_ih.T + h @ w_hh.T + b_ih + b_hh
        i_g = jax.nn.sigmoid(gates[:, 0 * H:1 * H])
        f_g = jax.nn.sigmoid(gates[:, 1 * H:2 * H])
        g_g = jnp.tanh(gates[:, 2 * H:3 * H])
        o_g = jax.nn.sigmoid(gates[:, 3 * H:4 * H])
        c = f_g * c + i_g * g_g
        h = o_g * jnp.tanh(c)
    return h @ w_out.T + b_out


if __name__ == "__main__":
    # Small shapes consistent with the module's forward.
    B, T, I, H, O = 2, 8, 4, 32, 3

    key = jax.random.PRNGKey(0)
    keys = jax.random.split(key, 7)
    bound = 1.0 / jnp.sqrt(jnp.float32(H))   # PyTorch default uniform init range

    inputs = jax.random.normal(keys[0], (B, T, I), dtype=jnp.float32)
    w_ih = jax.random.uniform(keys[1], (4 * H, I), minval=-bound, maxval=bound)
    w_hh = jax.random.uniform(keys[2], (4 * H, H), minval=-bound, maxval=bound)
    b_ih = jax.random.uniform(keys[3], (4 * H,), minval=-bound, maxval=bound)
    b_hh = jax.random.uniform(keys[4], (4 * H,), minval=-bound, maxval=bound)
    w_out = jax.random.uniform(keys[5], (O, H), minval=-bound, maxval=bound)
    b_out = jax.random.uniform(keys[6], (O,), minval=-bound, maxval=bound)

    # Weight prep happens ONCE, outside the per-call hot path.
    params = prepare_params(w_ih, w_hh, b_ih, b_hh, w_out, b_out)
    params = jax.tree_util.tree_map(jax.block_until_ready, params)

    out = predictor_forward(inputs, *params)
    out = jax.block_until_ready(out)

    ref = reference_forward(inputs, w_ih, w_hh, b_ih, b_hh, w_out, b_out)
    assert out.shape == (B, O)
    # Tolerance covers the (documented) bf16-mantissa MXU path for the
    # recurrent matmul; the reference's DEFAULT-precision f32 dots use the
    # same internal bf16 pass, so the observed delta is typically much smaller.
    assert jnp.allclose(out, ref, atol=2e-3, rtol=2e-3), (out, ref)

    print("KERNEL_OK")
</pallas_src>

<mosaic_0001>
module attributes {stable_mosaic.version = 11 : i64} {
  func.func @lstm_predictor_kernel(%arg0: memref<64x4xf32, #tpu.memory_space<vmem>>, %arg1: memref<4x512xf32, #tpu.memory_space<vmem>>, %arg2: memref<128x512xbf16, #tpu.memory_space<vmem>>, %arg3: memref<1x512xf32, #tpu.memory_space<vmem>>, %arg4: memref<128x3xf32, #tpu.memory_space<vmem>>, %arg5: memref<1x3xf32, #tpu.memory_space<vmem>>, %arg6: memref<8x3xf32, #tpu.memory_space<vmem>>, %arg7: memref<64x512xf32, #tpu.memory_space<vmem>>) attributes {dimension_semantics = [], scalar_prefetch = 0 : i64, scratch_operands = 1 : i64, tpu.core_type = #tpu.core_type<tc>} {
    %c0 = arith.constant 0 : index
    %c0_0 = arith.constant 0 : index
    %0 = vector.load %arg0[%c0, %c0_0] : memref<64x4xf32, #tpu.memory_space<vmem>>, vector<64x4xf32>
    %c0_1 = arith.constant 0 : index
    %c0_2 = arith.constant 0 : index
    %1 = vector.load %arg1[%c0_1, %c0_2] : memref<4x512xf32, #tpu.memory_space<vmem>>, vector<4x512xf32>
    %cst = arith.constant dense<0.000000e+00> : vector<64x512xf32>
    %2 = tpu.matmul %0, %1, %cst {dimension_numbers = #tpu.dot_dimension_numbers<[1], [0], [0], [1], [0, 0, 1, 1], [], []>} : vector<64x4xf32>, vector<4x512xf32>, vector<64x512xf32> -> vector<64x512xf32>
    %c0_3 = arith.constant 0 : index
    %c0_4 = arith.constant 0 : index
    %3 = vector.load %arg3[%c0_3, %c0_4] : memref<1x512xf32, #tpu.memory_space<vmem>>, vector<1x512xf32>
    %4 = vector.broadcast %3 : vector<1x512xf32> to vector<64x512xf32>
    %5 = arith.addf %2, %4 : vector<64x512xf32>
    %c0_5 = arith.constant 0 : index
    %c0_6 = arith.constant 0 : index
    %6 = vector.load %arg7[%c0_5, %c0_6] : memref<64x512xf32, #tpu.memory_space<vmem>>, vector<64x512xf32>
    tpu.vector_store %arg7[%c0_5, %c0_6], %5 {strides = array<i32>} : memref<64x512xf32, #tpu.memory_space<vmem>>, vector<64x512xf32>,
    %cst_7 = arith.constant 0.000000e+00 : f32
    %7 = vector.broadcast %cst_7 : f32 to vector<8x128xf32>
    %cst_8 = arith.constant 0.000000e+00 : f32
    %8 = vector.broadcast %cst_8 : f32 to vector<8x128xf32>
    %9 = arith.truncf %7 : vector<8x128xf32> to vector<8x128xbf16>
    %c0_9 = arith.constant 0 : index
    %c0_10 = arith.constant 0 : index
    %10 = vector.load %arg2[%c0_9, %c0_10] : memref<128x512xbf16, #tpu.memory_space<vmem>>, vector<128x512xbf16>
    %cst_11 = arith.constant dense<0.000000e+00> : vector<8x512xf32>
    %11 = tpu.matmul %9, %10, %cst_11 {dimension_numbers = #tpu.dot_dimension_numbers<[1], [0], [0], [1], [0, 0, 1, 1], [], []>} : vector<8x128xbf16>, vector<128x512xbf16>, vector<8x512xf32> -> vector<8x512xf32>
    %c0_12 = arith.constant 0 : index
    %c0_13 = arith.constant 0 : index
    %12 = vector.load %arg7[%c0_12, %c0_13] : memref<64x512xf32, #tpu.memory_space<vmem>>, vector<8x512xf32>
    %13 = arith.addf %12, %11 : vector<8x512xf32>
    %14 = vector.extract_strided_slice %13 {offsets = [0, 0], sizes = [8, 256], strides = [1, 1]} : vector<8x512xf32> to vector<8x256xf32>
    %15 = arith.negf %14 : vector<8x256xf32>
    %16 = math.exp %15 : vector<8x256xf32>
    %cst_14 = arith.constant 1.000000e+00 : f32
    %17 = vector.broadcast %cst_14 : f32 to vector<8x256xf32>
    %18 = arith.addf %17, %16 : vector<8x256xf32>
    %19 = arith.divf %17, %18 : vector<8x256xf32>
    %20 = vector.extract_strided_slice %19 {offsets = [0, 0], sizes = [8, 128], strides = [1, 1]} : vector<8x256xf32> to vector<8x128xf32>
    %21 = vector.extract_strided_slice %19 {offsets = [0, 128], sizes = [8, 128], strides = [1, 1]} : vector<8x256xf32> to vector<8x128xf32>
    %22 = vector.extract_strided_slice %13 {offsets = [0, 256], sizes = [8, 128], strides = [1, 1]} : vector<8x512xf32> to vector<8x128xf32>
    %23 = math.tanh %22 : vector<8x128xf32>
    %24 = vector.extract_strided_slice %13 {offsets = [0, 384], sizes = [8, 128], strides = [1, 1]} : vector<8x512xf32> to vector<8x128xf32>
    %25 = arith.negf %24 : vector<8x128xf32>
    %26 = math.exp %25 : vector<8x128xf32>
    %cst_15 = arith.constant 1.000000e+00 : f32
    %27 = vector.broadcast %cst_15 : f32 to vector<8x128xf32>
    %28 = arith.addf %27, %26 : vector<8x128xf32>
    %29 = arith.divf %27, %28 : vector<8x128xf32>
    %30 = arith.mulf %21, %8 : vector<8x128xf32>
    %31 = arith.mulf %20, %23 : vector<8x128xf32>
    %32 = arith.addf %30, %31 : vector<8x128xf32>
    %33 = math.tanh %32 : vector<8x128xf32>
    %34 = arith.mulf %29, %33 : vector<8x128xf32>
    %35 = arith.truncf %34 : vector<8x128xf32> to vector<8x128xbf16>
    %c0_16 = arith.constant 0 : index
    %c0_17 = arith.constant 0 : index
    %36 = vector.load %arg2[%c0_16, %c0_17] : memref<128x512xbf16, #tpu.memory_space<vmem>>, vector<128x512xbf16>
    %cst_18 = arith.constant dense<0.000000e+00> : vector<8x512xf32>
    %37 = tpu.matmul %35, %36, %cst_18 {dimension_numbers = #tpu.dot_dimension_numbers<[1], [0], [0], [1], [0, 0, 1, 1], [], []>} : vector<8x128xbf16>, vector<128x512xbf16>, vector<8x512xf32> -> vector<8x512xf32>
    %c8 = arith.constant 8 : index
    %c0_19 = arith.constant 0 : index
    %38 = vector.load %arg7[%c8, %c0_19] : memref<64x512xf32, #tpu.memory_space<vmem>>, vector<8x512xf32>
    %39 = arith.addf %38, %37 : vector<8x512xf32>
    %40 = vector.extract_strided_slice %39 {offsets = [0, 0], sizes = [8, 256], strides = [1, 1]} : vector<8x512xf32> to vector<8x256xf32>
    %41 = arith.negf %40 : vector<8x256xf32>
    %42 = math.exp %41 : vector<8x256xf32>
    %cst_20 = arith.constant 1.000000e+00 : f32
    %43 = vector.broadcast %cst_20 : f32 to vector<8x256xf32>
    %44 = arith.addf %43, %42 : vector<8x256xf32>
    %45 = arith.divf %43, %44 : vector<8x256xf32>
    %46 = vector.extract_strided_slice %45 {offsets = [0, 0], sizes = [8, 128], strides = [1, 1]} : vector<8x256xf32> to vector<8x128xf32>
    %47 = vector.extract_strided_slice %45 {offsets = [0, 128], sizes = [8, 128], strides = [1, 1]} : vector<8x256xf32> to vector<8x128xf32>
    %48 = vector.extract_strided_slice %39 {offsets = [0, 256], sizes = [8, 128], strides = [1, 1]} : vector<8x512xf32> to vector<8x128xf32>
    %49 = math.tanh %48 : vector<8x128xf32>
    %50 = vector.extract_strided_slice %39 {offsets = [0, 384], sizes = [8, 128], strides = [1, 1]} : vector<8x512xf32> to vector<8x128xf32>
    %51 = arith.negf %50 : vector<8x128xf32>
    %52 = math.exp %51 : vector<8x128xf32>
    %cst_21 = arith.constant 1.000000e+00 : f32
    %53 = vector.broadcast %cst_21 : f32 to vector<8x128xf32>
    %54 = arith.addf %53, %52 : vector<8x128xf32>
    %55 = arith.divf %53, %54 : vector<8x128xf32>
    %56 = arith.mulf %47, %32 : vector<8x128xf32>
    %57 = arith.mulf %46, %49 : vector<8x128xf32>
    %58 = arith.addf %56, %57 : vector<8x128xf32>
    %59 = math.tanh %58 : vector<8x128xf32>
    %60 = arith.mulf %55, %59 : vector<8x128xf32>
    %61 = arith.truncf %60 : vector<8x128xf32> to vector<8x128xbf16>
    %c0_22 = arith.constant 0 : index
    %c0_23 = arith.constant 0 : index
    %62 = vector.load %arg2[%c0_22, %c0_23] : memref<128x512xbf16, #tpu.memory_space<vmem>>, vector<128x512xbf16>
    %cst_24 = arith.constant dense<0.000000e+00> : vector<8x512xf32>
    %63 = tpu.matmul %61, %62, %cst_24 {dimension_numbers = #tpu.dot_dimension_numbers<[1], [0], [0], [1], [0, 0, 1, 1], [], []>} : vector<8x128xbf16>, vector<128x512xbf16>, vector<8x512xf32> -> vector<8x512xf32>
    %c16 = arith.constant 16 : index
    %c0_25 = arith.constant 0 : index
    %64 = vector.load %arg7[%c16, %c0_25] : memref<64x512xf32, #tpu.memory_space<vmem>>, vector<8x512xf32>
    %65 = arith.addf %64, %63 : vector<8x512xf32>
    %66 = vector.extract_strided_slice %65 {offsets = [0, 0], sizes = [8, 256], strides = [1, 1]} : vector<8x512xf32> to vector<8x256xf32>
    %67 = arith.negf %66 : vector<8x256xf32>
    %68 = math.exp %67 : vector<8x256xf32>
    %cst_26 = arith.constant 1.000000e+00 : f32
    %69 = vector.broadcast %cst_26 : f32 to vector<8x256xf32>
    %70 = arith.addf %69, %68 : vector<8x256xf32>
    %71 = arith.divf %69, %70 : vector<8x256xf32>
    %72 = vector.extract_strided_slice %71 {offsets = [0, 0], sizes = [8, 128], strides = [1, 1]} : vector<8x256xf32> to vector<8x128xf32>
    %73 = vector.extract_strided_slice %71 {offsets = [0, 128], sizes = [8, 128], strides = [1, 1]} : vector<8x256xf32> to vector<8x128xf32>
    %74 = vector.extract_strided_slice %65 {offsets = [0, 256], sizes = [8, 128], strides = [1, 1]} : vector<8x512xf32> to vector<8x128xf32>
    %75 = math.tanh %74 : vector<8x128xf32>
    %76 = vector.extract_strided_slice %65 {offsets = [0, 384], sizes = [8, 128], strides = [1, 1]} : vector<8x512xf32> to vector<8x128xf32>
    %77 = arith.negf %76 : vector<8x128xf32>
    %78 = math.exp %77 : vector<8x128xf32>
    %cst_27 = arith.constant 1.000000e+00 : f32
    %79 = vector.broadcast %cst_27 : f32 to vector<8x128xf32>
    %80 = arith.addf %79, %78 : vector<8x128xf32>
    %81 = arith.divf %79, %80 : vector<8x128xf32>
    %82 = arith.mulf %73, %58 : vector<8x128xf32>
    %83 = arith.mulf %72, %75 : vector<8x128xf32>
    %84 = arith.addf %82, %83 : vector<8x128xf32>
    %85 = math.tanh %84 : vector<8x128xf32>
    %86 = arith.mulf %81, %85 : vector<8x128xf32>
    %87 = arith.truncf %86 : vector<8x128xf32> to vector<8x128xbf16>
    %c0_28 = arith.constant 0 : index
    %c0_29 = arith.constant 0 : index
    %88 = vector.load %arg2[%c0_28, %c0_29] : memref<128x512xbf16, #tpu.memory_space<vmem>>, vector<128x512xbf16>
    %cst_30 = arith.constant dense<0.000000e+00> : vector<8x512xf32>
    %89 = tpu.matmul %87, %88, %cst_30 {dimension_numbers = #tpu.dot_dimension_numbers<[1], [0], [0], [1], [0, 0, 1, 1], [], []>} : vector<8x128xbf16>, vector<128x512xbf16>, vector<8x512xf32> -> vector<8x512xf32>
    %c24 = arith.constant 24 : index
    %c0_31 = arith.constant 0 : index
    %90 = vector.load %arg7[%c24, %c0_31] : memref<64x512xf32, #tpu.memory_space<vmem>>, vector<8x512xf32>
    %91 = arith.addf %90, %89 : vector<8x512xf32>
    %92 = vector.extract_strided_slice %91 {offsets = [0, 0], sizes = [8, 256], strides = [1, 1]} : vector<8x512xf32> to vector<8x256xf32>
    %93 = arith.negf %92 : vector<8x256xf32>
    %94 = math.exp %93 : vector<8x256xf32>
    %cst_32 = arith.constant 1.000000e+00 : f32
    %95 = vector.broadcast %cst_32 : f32 to vector<8x256xf32>
    %96 = arith.addf %95, %94 : vector<8x256xf32>
    %97 = arith.divf %95, %96 : vector<8x256xf32>
    %98 = vector.extract_strided_slice %97 {offsets = [0, 0], sizes = [8, 128], strides = [1, 1]} : vector<8x256xf32> to vector<8x128xf32>
    %99 = vector.extract_strided_slice %97 {offsets = [0, 128], sizes = [8, 128], strides = [1, 1]} : vector<8x256xf32> to vector<8x128xf32>
    %100 = vector.extract_strided_slice %91 {offsets = [0, 256], sizes = [8, 128], strides = [1, 1]} : vector<8x512xf32> to vector<8x128xf32>
    %101 = math.tanh %100 : vector<8x128xf32>
    %102 = vector.extract_strided_slice %91 {offsets = [0, 384], sizes = [8, 128], strides = [1, 1]} : vector<8x512xf32> to vector<8x128xf32>
    %103 = arith.negf %102 : vector<8x128xf32>
    %104 = math.exp %103 : vector<8x128xf32>
    %cst_33 = arith.constant 1.000000e+00 : f32
    %105 = vector.broadcast %cst_33 : f32 to vector<8x128xf32>
    %106 = arith.addf %105, %104 : vector<8x128xf32>
    %107 = arith.divf %105, %106 : vector<8x128xf32>
    %108 = arith.mulf %99, %84 : vector<8x128xf32>
    %109 = arith.mulf %98, %101 : vector<8x128xf32>
    %110 = arith.addf %108, %109 : vector<8x128xf32>
    %111 = math.tanh %110 : vector<8x128xf32>
    %112 = arith.mulf %107, %111 : vector<8x128xf32>
    %113 = arith.truncf %112 : vector<8x128xf32> to vector<8x128xbf16>
    %c0_34 = arith.constant 0 : index
    %c0_35 = arith.constant 0 : index
    %114 = vector.load %arg2[%c0_34, %c0_35] : memref<128x512xbf16, #tpu.memory_space<vmem>>, vector<128x512xbf16>
    %cst_36 = arith.constant dense<0.000000e+00> : vector<8x512xf32>
    %115 = tpu.matmul %113, %114, %cst_36 {dimension_numbers = #tpu.dot_dimension_numbers<[1], [0], [0], [1], [0, 0, 1, 1], [], []>} : vector<8x128xbf16>, vector<128x512xbf16>, vector<8x512xf32> -> vector<8x512xf32>
    %c32 = arith.constant 32 : index
    %c0_37 = arith.constant 0 : index
    %116 = vector.load %arg7[%c32, %c0_37] : memref<64x512xf32, #tpu.memory_space<vmem>>, vector<8x512xf32>
    %117 = arith.addf %116, %115 : vector<8x512xf32>
    %118 = vector.extract_strided_slice %117 {offsets = [0, 0], sizes = [8, 256], strides = [1, 1]} : vector<8x512xf32> to vector<8x256xf32>
    %119 = arith.negf %118 : vector<8x256xf32>
    %120 = math.exp %119 : vector<8x256xf32>
    %cst_38 = arith.constant 1.000000e+00 : f32
    %121 = vector.broadcast %cst_38 : f32 to vector<8x256xf32>
    %122 = arith.addf %121, %120 : vector<8x256xf32>
    %123 = arith.divf %121, %122 : vector<8x256xf32>
    %124 = vector.extract_strided_slice %123 {offsets = [0, 0], sizes = [8, 128], strides = [1, 1]} : vector<8x256xf32> to vector<8x128xf32>
    %125 = vector.extract_strided_slice %123 {offsets = [0, 128], sizes = [8, 128], strides = [1, 1]} : vector<8x256xf32> to vector<8x128xf32>
    %126 = vector.extract_strided_slice %117 {offsets = [0, 256], sizes = [8, 128], strides = [1, 1]} : vector<8x512xf32> to vector<8x128xf32>
    %127 = math.tanh %126 : vector<8x128xf32>
    %128 = vector.extract_strided_slice %117 {offsets = [0, 384], sizes = [8, 128], strides = [1, 1]} : vector<8x512xf32> to vector<8x128xf32>
    %129 = arith.negf %128 : vector<8x128xf32>
    %130 = math.exp %129 : vector<8x128xf32>
    %cst_39 = arith.constant 1.000000e+00 : f32
    %131 = vector.broadcast %cst_39 : f32 to vector<8x128xf32>
    %132 = arith.addf %131, %130 : vector<8x128xf32>
    %133 = arith.divf %131, %132 : vector<8x128xf32>
    %134 = arith.mulf %125, %110 : vector<8x128xf32>
    %135 = arith.mulf %124, %127 : vector<8x128xf32>
    %136 = arith.addf %134, %135 : vector<8x128xf32>
    %137 = math.tanh %136 : vector<8x128xf32>
    %138 = arith.mulf %133, %137 : vector<8x128xf32>
    %139 = arith.truncf %138 : vector<8x128xf32> to vector<8x128xbf16>
    %c0_40 = arith.constant 0 : index
    %c0_41 = arith.constant 0 : index
    %140 = vector.load %arg2[%c0_40, %c0_41] : memref<128x512xbf16, #tpu.memory_space<vmem>>, vector<128x512xbf16>
    %cst_42 = arith.constant dense<0.000000e+00> : vector<8x512xf32>
    %141 = tpu.matmul %139, %140, %cst_42 {dimension_numbers = #tpu.dot_dimension_numbers<[1], [0], [0], [1], [0, 0, 1, 1], [], []>} : vector<8x128xbf16>, vector<128x512xbf16>, vector<8x512xf32> -> vector<8x512xf32>
    %c40 = arith.constant 40 : index
    %c0_43 = arith.constant 0 : index
    %142 = vector.load %arg7[%c40, %c0_43] : memref<64x512xf32, #tpu.memory_space<vmem>>, vector<8x512xf32>
    %143 = arith.addf %142, %141 : vector<8x512xf32>
    %144 = vector.extract_strided_slice %143 {offsets = [0, 0], sizes = [8, 256], strides = [1, 1]} : vector<8x512xf32> to vector<8x256xf32>
    %145 = arith.negf %144 : vector<8x256xf32>
    %146 = math.exp %145 : vector<8x256xf32>
    %cst_44 = arith.constant 1.000000e+00 : f32
    %147 = vector.broadcast %cst_44 : f32 to vector<8x256xf32>
    %148 = arith.addf %147, %146 : vector<8x256xf32>
    %149 = arith.divf %147, %148 : vector<8x256xf32>
    %150 = vector.extract_strided_slice %149 {offsets = [0, 0], sizes = [8, 128], strides = [1, 1]} : vector<8x256xf32> to vector<8x128xf32>
    %151 = vector.extract_strided_slice %149 {offsets = [0, 128], sizes = [8, 128], strides = [1, 1]} : vector<8x256xf32> to vector<8x128xf32>
    %152 = vector.extract_strided_slice %143 {offsets = [0, 256], sizes = [8, 128], strides = [1, 1]} : vector<8x512xf32> to vector<8x128xf32>
    %153 = math.tanh %152 : vector<8x128xf32>
    %154 = vector.extract_strided_slice %143 {offsets = [0, 384], sizes = [8, 128], strides = [1, 1]} : vector<8x512xf32> to vector<8x128xf32>
    %155 = arith.negf %154 : vector<8x128xf32>
    %156 = math.exp %155 : vector<8x128xf32>
    %cst_45 = arith.constant 1.000000e+00 : f32
    %157 = vector.broadcast %cst_45 : f32 to vector<8x128xf32>
    %158 = arith.addf %157, %156 : vector<8x128xf32>
    %159 = arith.divf %157, %158 : vector<8x128xf32>
    %160 = arith.mulf %151, %136 : vector<8x128xf32>
    %161 = arith.mulf %150, %153 : vector<8x128xf32>
    %162 = arith.addf %160, %161 : vector<8x128xf32>
    %163 = math.tanh %162 : vector<8x128xf32>
    %164 = arith.mulf %159, %163 : vector<8x128xf32>
    %165 = arith.truncf %164 : vector<8x128xf32> to vector<8x128xbf16>
    %c0_46 = arith.constant 0 : index
    %c0_47 = arith.constant 0 : index
    %166 = vector.load %arg2[%c0_46, %c0_47] : memref<128x512xbf16, #tpu.memory_space<vmem>>, vector<128x512xbf16>
    %cst_48 = arith.constant dense<0.000000e+00> : vector<8x512xf32>
    %167 = tpu.matmul %165, %166, %cst_48 {dimension_numbers = #tpu.dot_dimension_numbers<[1], [0], [0], [1], [0, 0, 1, 1], [], []>} : vector<8x128xbf16>, vector<128x512xbf16>, vector<8x512xf32> -> vector<8x512xf32>
    %c48 = arith.constant 48 : index
    %c0_49 = arith.constant 0 : index
    %168 = vector.load %arg7[%c48, %c0_49] : memref<64x512xf32, #tpu.memory_space<vmem>>, vector<8x512xf32>
    %169 = arith.addf %168, %167 : vector<8x512xf32>
    %170 = vector.extract_strided_slice %169 {offsets = [0, 0], sizes = [8, 256], strides = [1, 1]} : vector<8x512xf32> to vector<8x256xf32>
    %171 = arith.negf %170 : vector<8x256xf32>
    %172 = math.exp %171 : vector<8x256xf32>
    %cst_50 = arith.constant 1.000000e+00 : f32
    %173 = vector.broadcast %cst_50 : f32 to vector<8x256xf32>
    %174 = arith.addf %173, %172 : vector<8x256xf32>
    %175 = arith.divf %173, %174 : vector<8x256xf32>
    %176 = vector.extract_strided_slice %175 {offsets = [0, 0], sizes = [8, 128], strides = [1, 1]} : vector<8x256xf32> to vector<8x128xf32>
    %177 = vector.extract_strided_slice %175 {offsets = [0, 128], sizes = [8, 128], strides = [1, 1]} : vector<8x256xf32> to vector<8x128xf32>
    %178 = vector.extract_strided_slice %169 {offsets = [0, 256], sizes = [8, 128], strides = [1, 1]} : vector<8x512xf32> to vector<8x128xf32>
    %179 = math.tanh %178 : vector<8x128xf32>
    %180 = vector.extract_strided_slice %169 {offsets = [0, 384], sizes = [8, 128], strides = [1, 1]} : vector<8x512xf32> to vector<8x128xf32>
    %181 = arith.negf %180 : vector<8x128xf32>
    %182 = math.exp %181 : vector<8x128xf32>
    %cst_51 = arith.constant 1.000000e+00 : f32
    %183 = vector.broadcast %cst_51 : f32 to vector<8x128xf32>
    %184 = arith.addf %183, %182 : vector<8x128xf32>
    %185 = arith.divf %183, %184 : vector<8x128xf32>
    %186 = arith.mulf %177, %162 : vector<8x128xf32>
    %187 = arith.mulf %176, %179 : vector<8x128xf32>
    %188 = arith.addf %186, %187 : vector<8x128xf32>
    %189 = math.tanh %188 : vector<8x128xf32>
    %190 = arith.mulf %185, %189 : vector<8x128xf32>
    %191 = arith.truncf %190 : vector<8x128xf32> to vector<8x128xbf16>
    %c0_52 = arith.constant 0 : index
    %c0_53 = arith.constant 0 : index
    %192 = vector.load %arg2[%c0_52, %c0_53] : memref<128x512xbf16, #tpu.memory_space<vmem>>, vector<128x512xbf16>
    %cst_54 = arith.constant dense<0.000000e+00> : vector<8x512xf32>
    %193 = tpu.matmul %191, %192, %cst_54 {dimension_numbers = #tpu.dot_dimension_numbers<[1], [0], [0], [1], [0, 0, 1, 1], [], []>} : vector<8x128xbf16>, vector<128x512xbf16>, vector<8x512xf32> -> vector<8x512xf32>
    %c56 = arith.constant 56 : index
    %c0_55 = arith.constant 0 : index
    %194 = vector.load %arg7[%c56, %c0_55] : memref<64x512xf32, #tpu.memory_space<vmem>>, vector<8x512xf32>
    %195 = arith.addf %194, %193 : vector<8x512xf32>
    %196 = vector.extract_strided_slice %195 {offsets = [0, 0], sizes = [8, 256], strides = [1, 1]} : vector<8x512xf32> to vector<8x256xf32>
    %197 = arith.negf %196 : vector<8x256xf32>
    %198 = math.exp %197 : vector<8x256xf32>
    %cst_56 = arith.constant 1.000000e+00 : f32
    %199 = vector.broadcast %cst_56 : f32 to vector<8x256xf32>
    %200 = arith.addf %199, %198 : vector<8x256xf32>
    %201 = arith.divf %199, %200 : vector<8x256xf32>
    %202 = vector.extract_strided_slice %201 {offsets = [0, 0], sizes = [8, 128], strides = [1, 1]} : vector<8x256xf32> to vector<8x128xf32>
    %203 = vector.extract_strided_slice %201 {offsets = [0, 128], sizes = [8, 128], strides = [1, 1]} : vector<8x256xf32> to vector<8x128xf32>
    %204 = vector.extract_strided_slice %195 {offsets = [0, 256], sizes = [8, 128], strides = [1, 1]} : vector<8x512xf32> to vector<8x128xf32>
    %205 = math.tanh %204 : vector<8x128xf32>
    %206 = vector.extract_strided_slice %195 {offsets = [0, 384], sizes = [8, 128], strides = [1, 1]} : vector<8x512xf32> to vector<8x128xf32>
    %207 = arith.negf %206 : vector<8x128xf32>
    %208 = math.exp %207 : vector<8x128xf32>
    %cst_57 = arith.constant 1.000000e+00 : f32
    %209 = vector.broadcast %cst_57 : f32 to vector<8x128xf32>
    %210 = arith.addf %209, %208 : vector<8x128xf32>
    %211 = arith.divf %209, %210 : vector<8x128xf32>
    %212 = arith.mulf %203, %188 : vector<8x128xf32>
    %213 = arith.mulf %202, %205 : vector<8x128xf32>
    %214 = arith.addf %212, %213 : vector<8x128xf32>
    %215 = math.tanh %214 : vector<8x128xf32>
    %216 = arith.mulf %211, %215 : vector<8x128xf32>
    %c0_58 = arith.constant 0 : index
    %c0_59 = arith.constant 0 : index
    %217 = vector.load %arg4[%c0_58, %c0_59] : memref<128x3xf32, #tpu.memory_space<vmem>>, vector<128x3xf32>
    %cst_60 = arith.constant dense<0.000000e+00> : vector<8x3xf32>
    %218 = tpu.matmul %216, %217, %cst_60 {dimension_numbers = #tpu.dot_dimension_numbers<[1], [0], [0], [1], [0, 0, 1, 1], [], []>} : vector<8x128xf32>, vector<128x3xf32>, vector<8x3xf32> -> vector<8x3xf32>
    %c0_61 = arith.constant 0 : index
    %c0_62 = arith.constant 0 : index
    %219 = vector.load %arg5[%c0_61, %c0_62] : memref<1x3xf32, #tpu.memory_space<vmem>>, vector<1x3xf32>
    %220 = vector.broadcast %219 : vector<1x3xf32> to vector<8x3xf32>
    %221 = arith.addf %218, %220 : vector<8x3xf32>
    %c0_63 = arith.constant 0 : index
    %c0_64 = arith.constant 0 : index
    %222 = vector.load %arg6[%c0_63, %c0_64] : memref<8x3xf32, #tpu.memory_space<vmem>>, vector<8x3xf32>
    tpu.vector_store %arg6[%c0_63, %c0_64], %221 {strides = array<i32>} : memref<8x3xf32, #tpu.memory_space<vmem>>, vector<8x3xf32>,
    return
  }
}

</mosaic_0001>

<llo_original>
// kernel: predictor_forward.1
$region0: #{predictor_forward.1}
  #allocation0 [shape = 'u32[]', space=smem, size = 0x4, offset = 0x4, fixed_abs, tag = 'smem constant byte address 0x4 - core index']
  #allocation1 [shape = 'u32[144,128]{1,0:T(1,128)}', space=vmem, size = 0x12000, scoped, tag = 'internal scratch']
  #allocation2 [shape = 'f32[64,512]{1,0:T(8,128)}', space=vmem, size = 0x20000, scoped, tag = 'scratch operand']
  %s0 = inlined_call_operand.vmem [shape: f32[64,4], index: 0, kind: input, shape index: {}]
  %s1 = inlined_call_operand.vmem [shape: f32[4,512], index: 1, kind: input, shape index: {}]
  %s2 = inlined_call_operand.hbm [shape: bf16[128,512], index: 2, kind: input, shape index: {}]
  %s3 = inlined_call_operand.vmem [shape: f32[1,512], index: 3, kind: input, shape index: {}]
  %s4 = inlined_call_operand.vmem [shape: f32[128,3], index: 4, kind: input, shape index: {}]
  %s5 = inlined_call_operand.vmem [shape: f32[1,3], index: 5, kind: input, shape index: {}]
  %s6 = inlined_call_operand.vmem [shape: f32[8,3], index: 6, kind: output, shape index: {}]
  %s7 = sld [smem:[#allocation0]]
  $region38: #{predictor_forward.1} parent=0
    _
  %s9 = ssub.s32 1, %s7
  %s10 = scalar_select 0, %s9, %s7
  $region1: #{predictor_forward.1} parent=0
    #allocation3 [shape = 'u8[131072]{0}', space=vmem, size = 0x20000, scoped, tag = 'input window, operand 2, single buffered']
    #allocation4 [shape = 's32[1]{0}', space=sflag, size = 0x4, scoped, tag = 'scoped memory for predictor_forward.1']
    %11 = vsyncpa [#allocation4], 0
    // Predicated region
    $region2: #{predictor_forward.1} parent=1 // pred_check
      _
    $region3: #{predictor_forward.1} parent=1 // pred_check_branch
      %13 = sbr.rel (0) target = $region5
    $region4: #{predictor_forward.1} parent=1 // pred_region
      _
    $region5: #{predictor_forward.1} parent=1 // pred_fallthru
      _
    // Predicated region
    $region6: #{predictor_forward.1} parent=1 // pred_check
      _
    $region7: #{predictor_forward.1} parent=1 // pred_check_branch
      %15 = sbr.rel (0) target = $region9
    $region8: #{predictor_forward.1} parent=1 // pred_region
      _
    $region9: #{predictor_forward.1} parent=1 // pred_fallthru
      _
    // Predicated region
    $region10: #{predictor_forward.1} parent=1 // pred_check
      _
    $region11: #{predictor_forward.1} parent=1 // pred_check_branch
      %17 = sbr.rel (0) target = $region13
    $region12: #{predictor_forward.1} parent=1 // pred_region
      %s19 = ssub.s32 4096, 4096
      %20 = vsyncadd [#allocation4], %s19
      %s21 = sshll.u32 [#allocation3], 4
      %s22 = int_to_ptr.vmem [resolvable:$true] %s21
      %27 = dma.hbm_to_vmem [thread:$0]  %s2, 4096, %s22, [#allocation4], 256, 256, 16
    $region13: #{predictor_forward.1} parent=1 // pred_fallthru
      _
    // Predicated region
    $region14: #{predictor_forward.1} parent=1 // pred_check
      _
    $region15: #{predictor_forward.1} parent=1 // pred_check_branch
      %29 = sbr.rel (0) target = $region17
    $region16: #{predictor_forward.1} parent=1 // pred_region
      _
    $region17: #{predictor_forward.1} parent=1 // pred_fallthru
      _
    // Predicated region
    $region18: #{predictor_forward.1} parent=1 // pred_check
      _
    $region19: #{predictor_forward.1} parent=1 // pred_check_branch
      %31 = sbr.rel (0) target = $region21
    $region20: #{predictor_forward.1} parent=1 // pred_region
      _
    $region21: #{predictor_forward.1} parent=1 // pred_fallthru
      _
    // Predicated region
    $region22: #{predictor_forward.1} parent=1 // pred_check
      _
    $region23: #{predictor_forward.1} parent=1 // pred_check_branch
      %33 = sbr.rel (0) target = $region25
    $region24: #{predictor_forward.1} parent=1 // pred_region
      _
    $region25: #{predictor_forward.1} parent=1 // pred_fallthru
      _
    // Predicated region
    $region26: #{predictor_forward.1} parent=1 // pred_check
      _
    $region27: #{predictor_forward.1} parent=1 // pred_check_branch
      %35 = sbr.rel (0) target = $region29
    $region28: #{predictor_forward.1} parent=1 // pred_region
      %36 = dma.done [#allocation4], 4096
    $region29: #{predictor_forward.1} parent=1 // pred_fallthru
      _
    %v38 = vld [vmem:[%s0] sm:$0xff]
    %v39 = vld [vmem:[%s0 + $0x8] sm:$0xff]
    %v40 = vld [vmem:[%s0 + $0x10] sm:$0xff]
    %v41 = vld [vmem:[%s0 + $0x18] sm:$0xff]
    %v42 = vld [vmem:[%s0 + $0x20] sm:$0xff]
    %v43 = vld [vmem:[%s0 + $0x28] sm:$0xff]
    %v44 = vld [vmem:[%s0 + $0x30] sm:$0xff]
    %v45 = vld [vmem:[%s0 + $0x38] sm:$0xff]
    %v46 = vld [vmem:[%s1] sm:$0xff]
    %v47 = vld [vmem:[%s1 + $0x8] sm:$0xff]
    %v48 = vld [vmem:[%s3] sm:$0xf]
    %v50 = vlaneseq
    %v51 = vshrl.u32 %v50, 7
    %v52 = vsub.s32 0, %v51
    %v53 = vrot.slane %v48, %v52
    %v54 = vlaneseq
    %v55 = vshrl.u32 %v54, 7
    %v56 = vsub.s32 1, %v55
    %v57 = vrot.slane %v48, %v56
    %v58 = vlaneseq
    %v59 = vshrl.u32 %v58, 7
    %v60 = vsub.s32 2, %v59
    %v61 = vrot.slane %v48, %v60
    %v62 = vlaneseq
    %v63 = vshrl.u32 %v62, 7
    %v64 = vsub.s32 3, %v63
    %v65 = vrot.slane %v48, %v64
    %v72 = vcombine.high %v46, %v46
    %v73 = vcombine.high %v47, %v47
    %vm74 = vcmask 31744
    %v76 = vsel %vm74, %v38, 0
    %v79 = vsel %vm74, %v39, 0
    %v82 = vsel %vm74, %v40, 0
    %v85 = vsel %vm74, %v41, 0
    %v88 = vsel %vm74, %v42, 0
    %v91 = vsel %vm74, %v43, 0
    %v94 = vsel %vm74, %v44, 0
    %v97 = vsel %vm74, %v45, 0
    %vm99 = vcmask 1043456
    %v100 = vsel %vm99, %v46, 0
    %v102 = vsel %vm99, %v72, 0
    %v104 = vsel %vm99, %v47, 0
    %v106 = vsel %vm99, %v73, 0
    %108 = vmatprep.subr.mxu0 0.0
    %109 = vmatpush1.msra.mxu0 0.0
    %110 = vmatprep.subr.mxu0 0.0
    %111 = vmatpush1.msra.mxu0 0.0
    %112 = vmatprep.subr.mxu0 0.0
    %113 = vmatpush1.msra.mxu0 0.0
    %114 = vmatprep.subr.mxu0 0.0
    %115 = vmatpush1.msra.mxu0 0.0
    %116 = vmatprep.subr.mxu0 0.0
    %117 = vmatpush1.msra.mxu0 0.0
    %118 = vmatprep.subr.mxu0 0.0
    %119 = vmatpush1.msra.mxu0 0.0
    %120 = vmatprep.subr.mxu0 0.0
    %121 = vmatpush1.msra.mxu0 0.0
    %122 = vmatprep.subr.mxu0 0.0
    %123 = vmatpush1.msra.mxu0 0.0
    %124 = vmatprep.subr.mxu0 0.0
    %125 = vmatpush1.msra.mxu0 0.0
    %126 = vmatprep.subr.mxu0 0.0
    %127 = vmatpush1.msra.mxu0 0.0
    %128 = vmatprep.subr.mxu0 0.0
    %129 = vmatpush1.msra.mxu0 0.0
    %130 = vmatprep.subr.mxu0 0.0
    %131 = vmatpush1.msra.mxu0 0.0
    %132 = vmatprep.subr.mxu0 0.0
    %133 = vmatpush1.msra.mxu0 0.0
    %134 = vmatprep.subr.mxu0 0.0
    %135 = vmatpush1.msra.mxu0 0.0
    %136 = vmatprep.subr.mxu0 0.0
    %137 = vmatpush1.msra.mxu0 0.0
    %138 = vmatprep.subr.mxu0 %v102
    %139 = vmatpush1.msra.mxu0 %v100
    %140 = vmatprep.subr.mxu0 0.0
    %141 = vmatpush2.msra.mxu0 0.0
    %142 = vmatprep.subr.mxu0 0.0
    %143 = vmatpush2.msra.mxu0 0.0
    %144 = vmatprep.subr.mxu0 0.0
    %145 = vmatpush2.msra.mxu0 0.0
    %146 = vmatprep.subr.mxu0 0.0
    %147 = vmatpush2.msra.mxu0 0.0
    %148 = vmatprep.subr.mxu0 0.0
    %149 = vmatpush2.msra.mxu0 0.0
    %150 = vmatprep.subr.mxu0 0.0
    %151 = vmatpush2.msra.mxu0 0.0
    %152 = vmatprep.subr.mxu0 0.0
    %153 = vmatpush2.msra.mxu0 0.0
    %154 = vmatprep.subr.mxu0 0.0
    %155 = vmatpush2.msra.mxu0 0.0
    %156 = vmatprep.subr.mxu0 0.0
    %157 = vmatpush2.msra.mxu0 0.0
    %158 = vmatprep.subr.mxu0 0.0
    %159 = vmatpush2.msra.mxu0 0.0
    %160 = vmatprep.subr.mxu0 0.0
    %161 = vmatpush2.msra.mxu0 0.0
    %162 = vmatprep.subr.mxu0 0.0
    %163 = vmatpush2.msra.mxu0 0.0
    %164 = vmatprep.subr.mxu0 0.0
    %165 = vmatpush2.msra.mxu0 0.0
    %166 = vmatprep.subr.mxu0 0.0
    %167 = vmatpush2.msra.mxu0 0.0
    %168 = vmatprep.subr.mxu0 0.0
    %169 = vmatpush2.msra.mxu0 0.0
    %170 = vmatprep.subr.mxu0 0.0
    %171 = vmatpush2.msra.mxu0 0.0
    %172 = vmatprep.mubr.f32.mxu0 0.0
    %173 = vmatmul.mubr.f32.gmra.mxu0 %v76
    %v174 = vpop.f32.mrf.mxu0
    %v175 = vadd.f32 %v53, %v174
    %v176 = vpop.f32.mrf.mxu0
    %v177 = vadd.f32 %v57, %v176
    %178 = vmatprep.mubr.f32.mxu0 0.0
    %179 = vmatmul.mubr.f32.gmra.mxu0 %v79
    %v180 = vpop.f32.mrf.mxu0
    %v181 = vadd.f32 %v53, %v180
    %v182 = vpop.f32.mrf.mxu0
    %v183 = vadd.f32 %v57, %v182
    %184 = vmatprep.mubr.f32.mxu0 0.0
    %185 = vmatmul.mubr.f32.gmra.mxu0 %v82
    %v186 = vpop.f32.mrf.mxu0
    %v187 = vadd.f32 %v53, %v186
    %v188 = vpop.f32.mrf.mxu0
    %v189 = vadd.f32 %v57, %v188
    %190 = vmatprep.mubr.f32.mxu0 0.0
    %191 = vmatmul.mubr.f32.gmra.mxu0 %v85
    %v192 = vpop.f32.mrf.mxu0
    %v193 = vadd.f32 %v53, %v192
    %v194 = vpop.f32.mrf.mxu0
    %v195 = vadd.f32 %v57, %v194
    %196 = vmatprep.mubr.f32.mxu0 0.0
    %197 = vmatmul.mubr.f32.gmra.mxu0 %v88
    %v198 = vpop.f32.mrf.mxu0
    %v199 = vadd.f32 %v53, %v198
    %v200 = vpop.f32.mrf.mxu0
    %v201 = vadd.f32 %v57, %v200
    %202 = vmatprep.mubr.f32.mxu0 0.0
    %203 = vmatmul.mubr.f32.gmra.mxu0 %v91
    %v204 = vpop.f32.mrf.mxu0
    %v205 = vadd.f32 %v53, %v204
    %v206 = vpop.f32.mrf.mxu0
    %v207 = vadd.f32 %v57, %v206
    %208 = vmatprep.mubr.f32.mxu0 0.0
    %209 = vmatmul.mubr.f32.gmra.mxu0 %v94
    %v210 = vpop.f32.mrf.mxu0
    %v211 = vadd.f32 %v53, %v210
    %v212 = vpop.f32.mrf.mxu0
    %v213 = vadd.f32 %v57, %v212
    %214 = vmatprep.mubr.f32.mxu0 0.0
    %215 = vmatmul.mubr.f32.gmra.mxu0 %v97
    %v216 = vpop.f32.mrf.mxu0
    %v217 = vadd.f32 %v53, %v216
    %v218 = vpop.f32.mrf.mxu0
    %v219 = vadd.f32 %v57, %v218
    %220 = vdwg.mxu0
    %221 = vmatprep.subr.mxu0 0.0
    %222 = vmatpush1.msra.mxu0 0.0
    %223 = vmatprep.subr.mxu0 0.0
    %224 = vmatpush1.msra.mxu0 0.0
    %225 = vmatprep.subr.mxu0 0.0
    %226 = vmatpush1.msra.mxu0 0.0
    %227 = vmatprep.subr.mxu0 0.0
    %228 = vmatpush1.msra.mxu0 0.0
    %229 = vmatprep.subr.mxu0 0.0
    %230 = vmatpush1.msra.mxu0 0.0
    %231 = vmatprep.subr.mxu0 0.0
    %232 = vmatpush1.msra.mxu0 0.0
    %233 = vmatprep.subr.mxu0 0.0
    %234 = vmatpush1.msra.mxu0 0.0
    %235 = vmatprep.subr.mxu0 0.0
    %236 = vmatpush1.msra.mxu0 0.0
    %237 = vmatprep.subr.mxu0 0.0
    %238 = vmatpush1.msra.mxu0 0.0
    %239 = vmatprep.subr.mxu0 0.0
    %240 = vmatpush1.msra.mxu0 0.0
    %241 = vmatprep.subr.mxu0 0.0
    %242 = vmatpush1.msra.mxu0 0.0
    %243 = vmatprep.subr.mxu0 0.0
    %244 = vmatpush1.msra.mxu0 0.0
    %245 = vmatprep.subr.mxu0 0.0
    %246 = vmatpush1.msra.mxu0 0.0
    %247 = vmatprep.subr.mxu0 0.0
    %248 = vmatpush1.msra.mxu0 0.0
    %249 = vmatprep.subr.mxu0 0.0
    %250 = vmatpush1.msra.mxu0 0.0
    %251 = vmatprep.subr.mxu0 %v106
    %252 = vmatpush1.msra.mxu0 %v104
    %253 = vmatprep.subr.mxu0 0.0
    %254 = vmatpush2.msra.mxu0 0.0
    %255 = vmatprep.subr.mxu0 0.0
    %256 = vmatpush2.msra.mxu0 0.0
    %257 = vmatprep.subr.mxu0 0.0
    %258 = vmatpush2.msra.mxu0 0.0
    %259 = vmatprep.subr.mxu0 0.0
    %260 = vmatpush2.msra.mxu0 0.0
    %261 = vmatprep.subr.mxu0 0.0
    %262 = vmatpush2.msra.mxu0 0.0
    %263 = vmatprep.subr.mxu0 0.0
    %264 = vmatpush2.msra.mxu0 0.0
    %265 = vmatprep.subr.mxu0 0.0
    %266 = vmatpush2.msra.mxu0 0.0
    %267 = vmatprep.subr.mxu0 0.0
    %268 = vmatpush2.msra.mxu0 0.0
    %269 = vmatprep.subr.mxu0 0.0
    %270 = vmatpush2.msra.mxu0 0.0
    %271 = vmatprep.subr.mxu0 0.0
    %272 = vmatpush2.msra.mxu0 0.0
    %273 = vmatprep.subr.mxu0 0.0
    %274 = vmatpush2.msra.mxu0 0.0
    %275 = vmatprep.subr.mxu0 0.0
    %276 = vmatpush2.msra.mxu0 0.0
    %277 = vmatprep.subr.mxu0 0.0
    %278 = vmatpush2.msra.mxu0 0.0
    %279 = vmatprep.subr.mxu0 0.0
    %280 = vmatpush2.msra.mxu0 0.0
    %281 = vmatprep.subr.mxu0 0.0
    %282 = vmatpush2.msra.mxu0 0.0
    %283 = vmatprep.subr.mxu0 0.0
    %284 = vmatpush2.msra.mxu0 0.0
    %285 = vmatprep.mubr.f32.mxu0 0.0
    %286 = vmatmul.mubr.f32.gmra.mxu0 %v76
    %v287 = vpop.f32.mrf.mxu0
    %v288 = vadd.f32 %v61, %v287
    %v289 = vpop.f32.mrf.mxu0
    %v290 = vadd.f32 %v65, %v289
    %291 = vmatprep.mubr.f32.mxu0 0.0
    %292 = vmatmul.mubr.f32.gmra.mxu0 %v79
    %v293 = vpop.f32.mrf.mxu0
    %v294 = vadd.f32 %v61, %v293
    %v295 = vpop.f32.mrf.mxu0
    %v296 = vadd.f32 %v65, %v295
    %297 = vmatprep.mubr.f32.mxu0 0.0
    %298 = vmatmul.mubr.f32.gmra.mxu0 %v82
    %v299 = vpop.f32.mrf.mxu0
    %v300 = vadd.f32 %v61, %v299
    %v301 = vpop.f32.mrf.mxu0
    %v302 = vadd.f32 %v65, %v301
    %303 = vmatprep.mubr.f32.mxu0 0.0
    %304 = vmatmul.mubr.f32.gmra.mxu0 %v85
    %v305 = vpop.f32.mrf.mxu0
    %v306 = vadd.f32 %v61, %v305
    %v307 = vpop.f32.mrf.mxu0
    %v308 = vadd.f32 %v65, %v307
    %309 = vmatprep.mubr.f32.mxu0 0.0
    %310 = vmatmul.mubr.f32.gmra.mxu0 %v88
    %v311 = vpop.f32.mrf.mxu0
    %v312 = vadd.f32 %v61, %v311
    %v313 = vpop.f32.mrf.mxu0
    %v314 = vadd.f32 %v65, %v313
    %315 = vmatprep.mubr.f32.mxu0 0.0
    %316 = vmatmul.mubr.f32.gmra.mxu0 %v91
    %v317 = vpop.f32.mrf.mxu0
    %v318 = vadd.f32 %v61, %v317
    %v319 = vpop.f32.mrf.mxu0
    %v320 = vadd.f32 %v65, %v319
    %321 = vmatprep.mubr.f32.mxu0 0.0
    %322 = vmatmul.mubr.f32.gmra.mxu0 %v94
    %v323 = vpop.f32.mrf.mxu0
    %v324 = vadd.f32 %v61, %v323
    %v325 = vpop.f32.mrf.mxu0
    %v326 = vadd.f32 %v65, %v325
    %327 = vmatprep.mubr.f32.mxu0 0.0
    %328 = vmatmul.mubr.f32.gmra.mxu0 %v97
    %v329 = vpop.f32.mrf.mxu0
    %v330 = vadd.f32 %v61, %v329
    %v331 = vpop.f32.mrf.mxu0
    %v332 = vadd.f32 %v65, %v331
    %333 = vdwg.mxu0
    %334 = vst [vmem:[#allocation2] sm:$0xff] %v175
    %335 = vst [vmem:[#allocation2 + $0x8] sm:$0xff] %v177
    %336 = vst [vmem:[#allocation2 + $0x10] sm:$0xff] %v288
    %337 = vst [vmem:[#allocation2 + $0x18] sm:$0xff] %v290
    %338 = vst [vmem:[#allocation2 + $0x20] sm:$0xff] %v181
    %339 = vst [vmem:[#allocation2 + $0x28] sm:$0xff] %v183
    %340 = vst [vmem:[#allocation2 + $0x30] sm:$0xff] %v294
    %341 = vst [vmem:[#allocation2 + $0x38] sm:$0xff] %v296
    %342 = vst [vmem:[#allocation2 + $0x40] sm:$0xff] %v187
    %343 = vst [vmem:[#allocation2 + $0x48] sm:$0xff] %v189
    %344 = vst [vmem:[#allocation2 + $0x50] sm:$0xff] %v300
    %345 = vst [vmem:[#allocation2 + $0x58] sm:$0xff] %v302
    %346 = vst [vmem:[#allocation2 + $0x60] sm:$0xff] %v193
    %347 = vst [vmem:[#allocation2 + $0x68] sm:$0xff] %v195
    %348 = vst [vmem:[#allocation2 + $0x70] sm:$0xff] %v306
    %349 = vst [vmem:[#allocation2 + $0x78] sm:$0xff] %v308
    %350 = vst [vmem:[#allocation2 + $0x80] sm:$0xff] %v199
    %351 = vst [vmem:[#allocation2 + $0x88] sm:$0xff] %v201
    %352 = vst [vmem:[#allocation2 + $0x90] sm:$0xff] %v312
    %353 = vst [vmem:[#allocation2 + $0x98] sm:$0xff] %v314
    %354 = vst [vmem:[#allocation2 + $0xa0] sm:$0xff] %v205
    %355 = vst [vmem:[#allocation2 + $0xa8] sm:$0xff] %v207
    %356 = vst [vmem:[#allocation2 + $0xb0] sm:$0xff] %v318
    %357 = vst [vmem:[#allocation2 + $0xb8] sm:$0xff] %v320
    %358 = vst [vmem:[#allocation2 + $0xc0] sm:$0xff] %v211
    %359 = vst [vmem:[#allocation2 + $0xc8] sm:$0xff] %v213
    %360 = vst [vmem:[#allocation2 + $0xd0] sm:$0xff] %v324
    %361 = vst [vmem:[#allocation2 + $0xd8] sm:$0xff] %v326
    %362 = vst [vmem:[#allocation2 + $0xe0] sm:$0xff] %v217
    %363 = vst [vmem:[#allocation2 + $0xe8] sm:$0xff] %v219
    %364 = vst [vmem:[#allocation2 + $0xf0] sm:$0xff] %v330
    %365 = vst [vmem:[#allocation2 + $0xf8] sm:$0xff] %v332
    %v366 = vld [vmem:[#allocation3] sm:$0xff]
    %v367 = vld [vmem:[#allocation3 + $0x8] sm:$0xff]
    %v368 = vld [vmem:[#allocation3 + $0x10] sm:$0xff]
    %v369 = vld [vmem:[#allocation3 + $0x18] sm:$0xff]
    %v370 = vld [vmem:[#allocation3 + $0x20] sm:$0xff]
    %v371 = vld [vmem:[#allocation3 + $0x28] sm:$0xff]
    %v372 = vld [vmem:[#allocation3 + $0x30] sm:$0xff]
    %v373 = vld [vmem:[#allocation3 + $0x38] sm:$0xff]
    %v374 = vld [vmem:[#allocation3 + $0x40] sm:$0xff]
    %v375 = vld [vmem:[#allocation3 + $0x48] sm:$0xff]
    %v376 = vld [vmem:[#allocation3 + $0x50] sm:$0xff]
    %v377 = vld [vmem:[#allocation3 + $0x58] sm:$0xff]
    %v378 = vld [vmem:[#allocation3 + $0x60] sm:$0xff]
    %v379 = vld [vmem:[#allocation3 + $0x68] sm:$0xff]
    %v380 = vld [vmem:[#allocation3 + $0x70] sm:$0xff]
    %v381 = vld [vmem:[#allocation3 + $0x78] sm:$0xff]
    %v382 = vld [vmem:[#allocation3 + $0x80] sm:$0xff]
    %v383 = vld [vmem:[#allocation3 + $0x88] sm:$0xff]
    %v384 = vld [vmem:[#allocation3 + $0x90] sm:$0xff]
    %v385 = vld [vmem:[#allocation3 + $0x98] sm:$0xff]
    %v386 = vld [vmem:[#allocation3 + $0xa0] sm:$0xff]
    %v387 = vld [vmem:[#allocation3 + $0xa8] sm:$0xff]
    %v388 = vld [vmem:[#allocation3 + $0xb0] sm:$0xff]
    %v389 = vld [vmem:[#allocation3 + $0xb8] sm:$0xff]
    %v390 = vld [vmem:[#allocation3 + $0xc0] sm:$0xff]
    %v391 = vld [vmem:[#allocation3 + $0xc8] sm:$0xff]
    %v392 = vld [vmem:[#allocation3 + $0xd0] sm:$0xff]
    %v393 = vld [vmem:[#allocation3 + $0xd8] sm:$0xff]
    %v394 = vld [vmem:[#allocation3 + $0xe0] sm:$0xff]
    %v395 = vld [vmem:[#allocation3 + $0xe8] sm:$0xff]
    %v396 = vld [vmem:[#allocation3 + $0xf0] sm:$0xff]
    %v397 = vld [vmem:[#allocation3 + $0xf8] sm:$0xff]
    %v430 = vunpack.c.l.b16 %v366
    %v431 = vunpack.c.h.b16 %v366
    %v432 = vunpack.c.l.b16 %v367
    %v433 = vunpack.c.h.b16 %v367
    %v434 = vunpack.c.l.b16 %v368
    %v435 = vunpack.c.h.b16 %v368
    %v436 = vunpack.c.l.b16 %v369
    %v437 = vunpack.c.h.b16 %v369
    %v438 = vunpack.c.l.b16 %v370
    %v439 = vunpack.c.h.b16 %v370
    %v440 = vunpack.c.l.b16 %v371
    %v441 = vunpack.c.h.b16 %v371
    %v442 = vunpack.c.l.b16 %v372
    %v443 = vunpack.c.h.b16 %v372
    %v444 = vunpack.c.l.b16 %v373
    %v445 = vunpack.c.h.b16 %v373
    %v446 = vunpack.c.l.b16 %v374
    %v447 = vunpack.c.h.b16 %v374
    %v448 = vunpack.c.l.b16 %v375
    %v449 = vunpack.c.h.b16 %v375
    %v450 = vunpack.c.l.b16 %v376
    %v451 = vunpack.c.h.b16 %v376
    %v452 = vunpack.c.l.b16 %v377
    %v453 = vunpack.c.h.b16 %v377
    %v454 = vunpack.c.l.b16 %v378
    %v455 = vunpack.c.h.b16 %v378
    %v456 = vunpack.c.l.b16 %v379
    %v457 = vunpack.c.h.b16 %v379
    %v458 = vunpack.c.l.b16 %v380
    %v459 = vunpack.c.h.b16 %v380
    %v460 = vunpack.c.l.b16 %v381
    %v461 = vunpack.c.h.b16 %v381
    %v462 = vunpack.c.l.b16 %v382
    %v463 = vunpack.c.h.b16 %v382
    %v464 = vunpack.c.l.b16 %v383
    %v465 = vunpack.c.h.b16 %v383
    %v466 = vunpack.c.l.b16 %v384
    %v467 = vunpack.c.h.b16 %v384
    %v468 = vunpack.c.l.b16 %v385
    %v469 = vunpack.c.h.b16 %v385
    %v470 = vunpack.c.l.b16 %v386
    %v471 = vunpack.c.h.b16 %v386
    %v472 = vunpack.c.l.b16 %v387
    %v473 = vunpack.c.h.b16 %v387
    %v474 = vunpack.c.l.b16 %v388
    %v475 = vunpack.c.h.b16 %v388
    %v476 = vunpack.c.l.b16 %v389
    %v477 = vunpack.c.h.b16 %v389
    %v478 = vunpack.c.l.b16 %v390
    %v479 = vunpack.c.h.b16 %v390
    %v480 = vunpack.c.l.b16 %v391
    %v481 = vunpack.c.h.b16 %v391
    %v482 = vunpack.c.l.b16 %v392
    %v483 = vunpack.c.h.b16 %v392
    %v484 = vunpack.c.l.b16 %v393
    %v485 = vunpack.c.h.b16 %v393
    %v486 = vunpack.c.l.b16 %v394
    %v487 = vunpack.c.h.b16 %v394
    %v488 = vunpack.c.l.b16 %v395
    %v489 = vunpack.c.h.b16 %v395
    %v490 = vunpack.c.l.b16 %v396
    %v491 = vunpack.c.h.b16 %v396
    %v492 = vunpack.c.l.b16 %v397
    %v493 = vunpack.c.h.b16 %v397
    %v494 = vpack.c.b16 %v434, %v430
    %v495 = vpack.c.b16 %v435, %v431
    %v496 = vpack.c.b16 %v436, %v432
    %v497 = vpack.c.b16 %v437, %v433
    %v498 = vpack.c.b16 %v442, %v438
    %v499 = vpack.c.b16 %v443, %v439
    %v500 = vpack.c.b16 %v444, %v440
    %v501 = vpack.c.b16 %v445, %v441
    %v502 = vpack.c.b16 %v450, %v446
    %v503 = vpack.c.b16 %v451, %v447
    %v504 = vpack.c.b16 %v452, %v448
    %v505 = vpack.c.b16 %v453, %v449
    %v506 = vpack.c.b16 %v458, %v454
    %v507 = vpack.c.b16 %v459, %v455
    %v508 = vpack.c.b16 %v460, %v456
    %v509 = vpack.c.b16 %v461, %v457
    %v510 = vpack.c.b16 %v466, %v462
    %v511 = vpack.c.b16 %v467, %v463
    %v512 = vpack.c.b16 %v468, %v464
    %v513 = vpack.c.b16 %v469, %v465
    %v514 = vpack.c.b16 %v474, %v470
    %v515 = vpack.c.b16 %v475, %v471
    %v516 = vpack.c.b16 %v476, %v472
    %v517 = vpack.c.b16 %v477, %v473
    %v518 = vpack.c.b16 %v482, %v478
    %v519 = vpack.c.b16 %v483, %v479
    %v520 = vpack.c.b16 %v484, %v480
    %v521 = vpack.c.b16 %v485, %v481
    %v522 = vpack.c.b16 %v490, %v486
    %v523 = vpack.c.b16 %v491, %v487
    %v524 = vpack.c.b16 %v492, %v488
    %v525 = vpack.c.b16 %v493, %v489
    %558 = vmatprep.subr.bf16.mxu0 %v523
    %559 = vmatpush1.bf16.msra.mxu0 %v522
    %560 = vmatprep.subr.bf16.mxu0 %v519
    %561 = vmatpush1.bf16.msra.mxu0 %v518
    %562 = vmatprep.subr.bf16.mxu0 %v515
    %563 = vmatpush1.bf16.msra.mxu0 %v514
    %564 = vmatprep.subr.bf16.mxu0 %v511
    %565 = vmatpush1.bf16.msra.mxu0 %v510
    %566 = vmatprep.subr.bf16.mxu0 %v507
    %567 = vmatpush1.bf16.msra.mxu0 %v506
    %568 = vmatprep.subr.bf16.mxu0 %v503
    %569 = vmatpush1.bf16.msra.mxu0 %v502
    %570 = vmatprep.subr.bf16.mxu0 %v499
    %571 = vmatpush1.bf16.msra.mxu0 %v498
    %572 = vmatprep.subr.bf16.mxu0 %v495
    %573 = vmatpush1.bf16.msra.mxu0 %v494
    %574 = vmatprep.subr.bf16.mxu0 0
    %575 = vmatpush2.bf16.msra.mxu0 0
    %576 = vmatprep.subr.bf16.mxu0 0
    %577 = vmatpush2.bf16.msra.mxu0 0
    %578 = vmatprep.subr.bf16.mxu0 0
    %579 = vmatpush2.bf16.msra.mxu0 0
    %580 = vmatprep.subr.bf16.mxu0 0
    %581 = vmatpush2.bf16.msra.mxu0 0
    %582 = vmatprep.subr.bf16.mxu0 0
    %583 = vmatpush2.bf16.msra.mxu0 0
    %584 = vmatprep.subr.bf16.mxu0 0
    %585 = vmatpush2.bf16.msra.mxu0 0
    %586 = vmatprep.subr.bf16.mxu0 0
    %587 = vmatpush2.bf16.msra.mxu0 0
    %588 = vmatprep.subr.bf16.mxu0 0
    %589 = vmatpush2.bf16.msra.mxu0 0
    %590 = vmatprep.mubr.bf16.mxu0 0
    %591 = vmatmul.mubr.bf16.gmra.mxu0 0
    %v592 = vpop.f32.mrf.mxu0
    %v593 = vadd.f32 0.0, %v592
    %v594 = vpop.f32.mrf.mxu0
    %v595 = vadd.f32 0.0, %v594
    %v596 = vpop.f32.mrf.mxu0
    %v597 = vpop.f32.mrf.mxu0
    %598 = vdwg.mxu0
    %599 = vmatprep.subr.bf16.mxu0 %v525
    %600 = vmatpush1.bf16.msra.mxu0 %v524
    %601 = vmatprep.subr.bf16.mxu0 %v521
    %602 = vmatpush1.bf16.msra.mxu0 %v520
    %603 = vmatprep.subr.bf16.mxu0 %v517
    %604 = vmatpush1.bf16.msra.mxu0 %v516
    %605 = vmatprep.subr.bf16.mxu0 %v513
    %606 = vmatpush1.bf16.msra.mxu0 %v512
    %607 = vmatprep.subr.bf16.mxu0 %v509
    %608 = vmatpush1.bf16.msra.mxu0 %v508
    %609 = vmatprep.subr.bf16.mxu0 %v505
    %610 = vmatpush1.bf16.msra.mxu0 %v504
    %611 = vmatprep.subr.bf16.mxu0 %v501
    %612 = vmatpush1.bf16.msra.mxu0 %v500
    %613 = vmatprep.subr.bf16.mxu0 %v497
    %614 = vmatpush1.bf16.msra.mxu0 %v496
    %615 = vmatprep.subr.bf16.mxu0 0
    %616 = vmatpush2.bf16.msra.mxu0 0
    %617 = vmatprep.subr.bf16.mxu0 0
    %618 = vmatpush2.bf16.msra.mxu0 0
    %619 = vmatprep.subr.bf16.mxu0 0
    %620 = vmatpush2.bf16.msra.mxu0 0
    %621 = vmatprep.subr.bf16.mxu0 0
    %622 = vmatpush2.bf16.msra.mxu0 0
    %623 = vmatprep.subr.bf16.mxu0 0
    %624 = vmatpush2.bf16.msra.mxu0 0
    %625 = vmatprep.subr.bf16.mxu0 0
    %626 = vmatpush2.bf16.msra.mxu0 0
    %627 = vmatprep.subr.bf16.mxu0 0
    %628 = vmatpush2.bf16.msra.mxu0 0
    %629 = vmatprep.subr.bf16.mxu0 0
    %630 = vmatpush2.bf16.msra.mxu0 0
    %631 = vmatprep.mubr.bf16.mxu0 0
    %632 = vmatmul.mubr.bf16.gmra.mxu0 0
    %v633 = vpop.f32.mrf.mxu0
    %v634 = vadd.f32 0.0, %v633
    %v635 = vpop.f32.mrf.mxu0
    %v636 = vadd.f32 0.0, %v635
    %v637 = vpop.f32.mrf.mxu0
    %v638 = vpop.f32.mrf.mxu0
    %639 = vdwg.mxu0
    %v640 = vld [vmem:[#allocation2] sm:$0xff]
    %v641 = vld [vmem:[#allocation2 + $0x8] sm:$0xff]
    %v642 = vld [vmem:[#allocation2 + $0x10] sm:$0xff]
    %v643 = vld [vmem:[#allocation2 + $0x18] sm:$0xff]
    %v644 = vadd.f32 %v640, %v593
    %v645 = vadd.f32 %v641, %v595
    %v646 = vadd.f32 %v642, %v634
    %v647 = vadd.f32 %v643, %v636
    %v648 = vxor.u32 %v644, 2147483648
    %v649 = vxor.u32 %v645, 2147483648
    %v650 = vmul.f32 %v648, 1.442695
    %v651 = vpow.pop %v650
    %v652 = vmul.f32 %v649, 1.442695
    %v653 = vpow.pop %v652
    %v654 = vadd.f32 %v651, 1.0
    %v655 = vadd.f32 %v653, 1.0
    %v656 = vrcp.pop %v654
    %v657 = vmul.f32 1.0, %v656
    %v658 = vrcp.pop %v655
    %v659 = vmul.f32 1.0, %v658
    %v660 = vtanh.pop %v646
    %v661 = vxor.u32 %v647, 2147483648
    %v662 = vmul.f32 %v661, 1.442695
    %v663 = vpow.pop %v662
    %v664 = vadd.f32 %v663, 1.0
    %v665 = vrcp.pop %v664
    %v666 = vmul.f32 1.0, %v665
    %v667 = vmul.f32 %v659, 0.0
    %v668 = vmul.f32 %v657, %v660
    %v669 = vadd.f32 %v667, %v668
    %v670 = vtanh.pop %v669
    %v671 = vmul.f32 %v666, %v670
    %v672 = vpack.c.bf16 %v671, %v671
    %673 = vmatprep.subr.bf16.mxu0 %v523
    %674 = vmatpush1.bf16.msra.mxu0 %v522
    %675 = vmatprep.subr.bf16.mxu0 %v519
    %676 = vmatpush1.bf16.msra.mxu0 %v518
    %677 = vmatprep.subr.bf16.mxu0 %v515
    %678 = vmatpush1.bf16.msra.mxu0 %v514
    %679 = vmatprep.subr.bf16.mxu0 %v511
    %680 = vmatpush1.bf16.msra.mxu0 %v510
    %681 = vmatprep.subr.bf16.mxu0 %v507
    %682 = vmatpush1.bf16.msra.mxu0 %v506
    %683 = vmatprep.subr.bf16.mxu0 %v503
    %684 = vmatpush1.bf16.msra.mxu0 %v502
    %685 = vmatprep.subr.bf16.mxu0 %v499
    %686 = vmatpush1.bf16.msra.mxu0 %v498
    %687 = vmatprep.subr.bf16.mxu0 %v495
    %688 = vmatpush1.bf16.msra.mxu0 %v494
    %689 = vmatprep.subr.bf16.mxu0 0
    %690 = vmatpush2.bf16.msra.mxu0 0
    %691 = vmatprep.subr.bf16.mxu0 0
    %692 = vmatpush2.bf16.msra.mxu0 0
    %693 = vmatprep.subr.bf16.mxu0 0
    %694 = vmatpush2.bf16.msra.mxu0 0
    %695 = vmatprep.subr.bf16.mxu0 0
    %696 = vmatpush2.bf16.msra.mxu0 0
    %697 = vmatprep.subr.bf16.mxu0 0
    %698 = vmatpush2.bf16.msra.mxu0 0
    %699 = vmatprep.subr.bf16.mxu0 0
    %700 = vmatpush2.bf16.msra.mxu0 0
    %701 = vmatprep.subr.bf16.mxu0 0
    %702 = vmatpush2.bf16.msra.mxu0 0
    %703 = vmatprep.subr.bf16.mxu0 0
    %704 = vmatpush2.bf16.msra.mxu0 0
    %705 = vmatprep.mubr.bf16.mxu0 0
    %706 = vmatmul.mubr.bf16.gmra.mxu0 %v672
    %v707 = vpop.f32.mrf.mxu0
    %v708 = vadd.f32 0.0, %v707
    %v709 = vpop.f32.mrf.mxu0
    %v710 = vadd.f32 0.0, %v709
    %v711 = vpop.f32.mrf.mxu0
    %v712 = vpop.f32.mrf.mxu0
    %713 = vdwg.mxu0
    %714 = vmatprep.subr.bf16.mxu0 %v525
    %715 = vmatpush1.bf16.msra.mxu0 %v524
    %716 = vmatprep.subr.bf16.mxu0 %v521
    %717 = vmatpush1.bf16.msra.mxu0 %v520
    %718 = vmatprep.subr.bf16.mxu0 %v517
    %719 = vmatpush1.bf16.msra.mxu0 %v516
    %720 = vmatprep.subr.bf16.mxu0 %v513
    %721 = vmatpush1.bf16.msra.mxu0 %v512
    %722 = vmatprep.subr.bf16.mxu0 %v509
    %723 = vmatpush1.bf16.msra.mxu0 %v508
    %724 = vmatprep.subr.bf16.mxu0 %v505
    %725 = vmatpush1.bf16.msra.mxu0 %v504
    %726 = vmatprep.subr.bf16.mxu0 %v501
    %727 = vmatpush1.bf16.msra.mxu0 %v500
    %728 = vmatprep.subr.bf16.mxu0 %v497
    %729 = vmatpush1.bf16.msra.mxu0 %v496
    %730 = vmatprep.subr.bf16.mxu0 0
    %731 = vmatpush2.bf16.msra.mxu0 0
    %732 = vmatprep.subr.bf16.mxu0 0
    %733 = vmatpush2.bf16.msra.mxu0 0
    %734 = vmatprep.subr.bf16.mxu0 0
    %735 = vmatpush2.bf16.msra.mxu0 0
    %736 = vmatprep.subr.bf16.mxu0 0
    %737 = vmatpush2.bf16.msra.mxu0 0
    %738 = vmatprep.subr.bf16.mxu0 0
    %739 = vmatpush2.bf16.msra.mxu0 0
    %740 = vmatprep.subr.bf16.mxu0 0
    %741 = vmatpush2.bf16.msra.mxu0 0
    %742 = vmatprep.subr.bf16.mxu0 0
    %743 = vmatpush2.bf16.msra.mxu0 0
    %744 = vmatprep.subr.bf16.mxu0 0
    %745 = vmatpush2.bf16.msra.mxu0 0
    %746 = vmatprep.mubr.bf16.mxu0 0
    %747 = vmatmul.mubr.bf16.gmra.mxu0 %v672
    %v748 = vpop.f32.mrf.mxu0
    %v749 = vadd.f32 0.0, %v748
    %v750 = vpop.f32.mrf.mxu0
    %v751 = vadd.f32 0.0, %v750
    %v752 = vpop.f32.mrf.mxu0
    %v753 = vpop.f32.mrf.mxu0
    %754 = vdwg.mxu0
    %v755 = vld [vmem:[#allocation2 + $0x20] sm:$0xff]
    %v756 = vld [vmem:[#allocation2 + $0x28] sm:$0xff]
    %v757 = vld [vmem:[#allocation2 + $0x30] sm:$0xff]
    %v758 = vld [vmem:[#allocation2 + $0x38] sm:$0xff]
    %v759 = vadd.f32 %v755, %v708
    %v760 = vadd.f32 %v756, %v710
    %v761 = vadd.f32 %v757, %v749
    %v762 = vadd.f32 %v758, %v751
    %v763 = vxor.u32 %v759, 2147483648
    %v764 = vxor.u32 %v760, 2147483648
    %v765 = vmul.f32 %v763, 1.442695
    %v766 = vpow.pop %v765
    %v767 = vmul.f32 %v764, 1.442695
    %v768 = vpow.pop %v767
    %v769 = vadd.f32 %v766, 1.0
    %v770 = vadd.f32 %v768, 1.0
    %v771 = vrcp.pop %v769
    %v772 = vmul.f32 1.0, %v771
    %v773 = vrcp.pop %v770
    %v774 = vmul.f32 1.0, %v773
    %v775 = vtanh.pop %v761
    %v776 = vxor.u32 %v762, 2147483648
    %v777 = vmul.f32 %v776, 1.442695
    %v778 = vpow.pop %v777
    %v779 = vadd.f32 %v778, 1.0
    %v780 = vrcp.pop %v779
    %v781 = vmul.f32 1.0, %v780
    %v782 = vmul.f32 %v774, %v669
    %v783 = vmul.f32 %v772, %v775
    %v784 = vadd.f32 %v782, %v783
    %v785 = vtanh.pop %v784
    %v786 = vmul.f32 %v781, %v785
    %v787 = vpack.c.bf16 %v786, %v786
    %788 = vmatprep.subr.bf16.mxu0 %v523
    %789 = vmatpush1.bf16.msra.mxu0 %v522
    %790 = vmatprep.subr.bf16.mxu0 %v519
    %791 = vmatpush1.bf16.msra.mxu0 %v518
    %792 = vmatprep.subr.bf16.mxu0 %v515
    %793 = vmatpush1.bf16.msra.mxu0 %v514
    %794 = vmatprep.subr.bf16.mxu0 %v511
    %795 = vmatpush1.bf16.msra.mxu0 %v510
    %796 = vmatprep.subr.bf16.mxu0 %v507
    %797 = vmatpush1.bf16.msra.mxu0 %v506
    %798 = vmatprep.subr.bf16.mxu0 %v503
    %799 = vmatpush1.bf16.msra.mxu0 %v502
    %800 = vmatprep.subr.bf16.mxu0 %v499
    %801 = vmatpush1.bf16.msra.mxu0 %v498
    %802 = vmatprep.subr.bf16.mxu0 %v495
    %803 = vmatpush1.bf16.msra.mxu0 %v494
    %804 = vmatprep.subr.bf16.mxu0 0
    %805 = vmatpush2.bf16.msra.mxu0 0
    %806 = vmatprep.subr.bf16.mxu0 0
    %807 = vmatpush2.bf16.msra.mxu0 0
    %808 = vmatprep.subr.bf16.mxu0 0
    %809 = vmatpush2.bf16.msra.mxu0 0
    %810 = vmatprep.subr.bf16.mxu0 0
    %811 = vmatpush2.bf16.msra.mxu0 0
    %812 = vmatprep.subr.bf16.mxu0 0
    %813 = vmatpush2.bf16.msra.mxu0 0
    %814 = vmatprep.subr.bf16.mxu0 0
    %815 = vmatpush2.bf16.msra.mxu0 0
    %816 = vmatprep.subr.bf16.mxu0 0
    %817 = vmatpush2.bf16.msra.mxu0 0
    %818 = vmatprep.subr.bf16.mxu0 0
    %819 = vmatpush2.bf16.msra.mxu0 0
    %820 = vmatprep.mubr.bf16.mxu0 0
    %821 = vmatmul.mubr.bf16.gmra.mxu0 %v787
    %v822 = vpop.f32.mrf.mxu0
    %v823 = vadd.f32 0.0, %v822
    %v824 = vpop.f32.mrf.mxu0
    %v825 = vadd.f32 0.0, %v824
    %v826 = vpop.f32.mrf.mxu0
    %v827 = vpop.f32.mrf.mxu0
    %828 = vdwg.mxu0
    %829 = vmatprep.subr.bf16.mxu0 %v525
    %830 = vmatpush1.bf16.msra.mxu0 %v524
    %831 = vmatprep.subr.bf16.mxu0 %v521
    %832 = vmatpush1.bf16.msra.mxu0 %v520
    %833 = vmatprep.subr.bf16.mxu0 %v517
    %834 = vmatpush1.bf16.msra.mxu0 %v516
    %835 = vmatprep.subr.bf16.mxu0 %v513
    %836 = vmatpush1.bf16.msra.mxu0 %v512
    %837 = vmatprep.subr.bf16.mxu0 %v509
    %838 = vmatpush1.bf16.msra.mxu0 %v508
    %839 = vmatprep.subr.bf16.mxu0 %v505
    %840 = vmatpush1.bf16.msra.mxu0 %v504
    %841 = vmatprep.subr.bf16.mxu0 %v501
    %842 = vmatpush1.bf16.msra.mxu0 %v500
    %843 = vmatprep.subr.bf16.mxu0 %v497
    %844 = vmatpush1.bf16.msra.mxu0 %v496
    %845 = vmatprep.subr.bf16.mxu0 0
    %846 = vmatpush2.bf16.msra.mxu0 0
    %847 = vmatprep.subr.bf16.mxu0 0
    %848 = vmatpush2.bf16.msra.mxu0 0
    %849 = vmatprep.subr.bf16.mxu0 0
    %850 = vmatpush2.bf16.msra.mxu0 0
    %851 = vmatprep.subr.bf16.mxu0 0
    %852 = vmatpush2.bf16.msra.mxu0 0
    %853 = vmatprep.subr.bf16.mxu0 0
    %854 = vmatpush2.bf16.msra.mxu0 0
    %855 = vmatprep.subr.bf16.mxu0 0
    %856 = vmatpush2.bf16.msra.mxu0 0
    %857 = vmatprep.subr.bf16.mxu0 0
    %858 = vmatpush2.bf16.msra.mxu0 0
    %859 = vmatprep.subr.bf16.mxu0 0
    %860 = vmatpush2.bf16.msra.mxu0 0
    %861 = vmatprep.mubr.bf16.mxu0 0
    %862 = vmatmul.mubr.bf16.gmra.mxu0 %v787
    %v863 = vpop.f32.mrf.mxu0
    %v864 = vadd.f32 0.0, %v863
    %v865 = vpop.f32.mrf.mxu0
    %v866 = vadd.f32 0.0, %v865
    %v867 = vpop.f32.mrf.mxu0
    %v868 = vpop.f32.mrf.mxu0
    %869 = vdwg.mxu0
    %v870 = vld [vmem:[#allocation2 + $0x40] sm:$0xff]
    %v871 = vld [vmem:[#allocation2 + $0x48] sm:$0xff]
    %v872 = vld [vmem:[#allocation2 + $0x50] sm:$0xff]
    %v873 = vld [vmem:[#allocation2 + $0x58] sm:$0xff]
    %v874 = vadd.f32 %v870, %v823
    %v875 = vadd.f32 %v871, %v825
    %v876 = vadd.f32 %v872, %v864
    %v877 = vadd.f32 %v873, %v866
    %v878 = vxor.u32 %v874, 2147483648
    %v879 = vxor.u32 %v875, 2147483648
    %v880 = vmul.f32 %v878, 1.442695
    %v881 = vpow.pop %v880
    %v882 = vmul.f32 %v879, 1.442695
    %v883 = vpow.pop %v882
    %v884 = vadd.f32 %v881, 1.0
    %v885 = vadd.f32 %v883, 1.0
    %v886 = vrcp.pop %v884
    %v887 = vmul.f32 1.0, %v886
    %v888 = vrcp.pop %v885
    %v889 = vmul.f32 1.0, %v888
    %v890 = vtanh.pop %v876
    %v891 = vxor.u32 %v877, 2147483648
    %v892 = vmul.f32 %v891, 1.442695
    %v893 = vpow.pop %v892
    %v894 = vadd.f32 %v893, 1.0
    %v895 = vrcp.pop %v894
    %v896 = vmul.f32 1.0, %v895
    %v897 = vmul.f32 %v889, %v784
    %v898 = vmul.f32 %v887, %v890
    %v899 = vadd.f32 %v897, %v898
    %v900 = vtanh.pop %v899
    %v901 = vmul.f32 %v896, %v900
    %v902 = vpack.c.bf16 %v901, %v901
    %903 = vmatprep.subr.bf16.mxu0 %v523
    %904 = vmatpush1.bf16.msra.mxu0 %v522
    %905 = vmatprep.subr.bf16.mxu0 %v519
    %906 = vmatpush1.bf16.msra.mxu0 %v518
    %907 = vmatprep.subr.bf16.mxu0 %v515
    %908 = vmatpush1.bf16.msra.mxu0 %v514
    %909 = vmatprep.subr.bf16.mxu0 %v511
    %910 = vmatpush1.bf16.msra.mxu0 %v510
    %911 = vmatprep.subr.bf16.mxu0 %v507
    %912 = vmatpush1.bf16.msra.mxu0 %v506
    %913 = vmatprep.subr.bf16.mxu0 %v503
    %914 = vmatpush1.bf16.msra.mxu0 %v502
    %915 = vmatprep.subr.bf16.mxu0 %v499
    %916 = vmatpush1.bf16.msra.mxu0 %v498
    %917 = vmatprep.subr.bf16.mxu0 %v495
    %918 = vmatpush1.bf16.msra.mxu0 %v494
    %919 = vmatprep.subr.bf16.mxu0 0
    %920 = vmatpush2.bf16.msra.mxu0 0
    %921 = vmatprep.subr.bf16.mxu0 0
    %922 = vmatpush2.bf16.msra.mxu0 0
    %923 = vmatprep.subr.bf16.mxu0 0
    %924 = vmatpush2.bf16.msra.mxu0 0
    %925 = vmatprep.subr.bf16.mxu0 0
    %926 = vmatpush2.bf16.msra.mxu0 0
    %927 = vmatprep.subr.bf16.mxu0 0
    %928 = vmatpush2.bf16.msra.mxu0 0
    %929 = vmatprep.subr.bf16.mxu0 0
    %930 = vmatpush2.bf16.msra.mxu0 0
    %931 = vmatprep.subr.bf16.mxu0 0
    %932 = vmatpush2.bf16.msra.mxu0 0
    %933 = vmatprep.subr.bf16.mxu0 0
    %934 = vmatpush2.bf16.msra.mxu0 0
    %935 = vmatprep.mubr.bf16.mxu0 0
    %936 = vmatmul.mubr.bf16.gmra.mxu0 %v902
    %v937 = vpop.f32.mrf.mxu0
    %v938 = vadd.f32 0.0, %v937
    %v939 = vpop.f32.mrf.mxu0
    %v940 = vadd.f32 0.0, %v939
    %v941 = vpop.f32.mrf.mxu0
    %v942 = vpop.f32.mrf.mxu0
    %943 = vdwg.mxu0
    %944 = vmatprep.subr.bf16.mxu0 %v525
    %945 = vmatpush1.bf16.msra.mxu0 %v524
    %946 = vmatprep.subr.bf16.mxu0 %v521
    %947 = vmatpush1.bf16.msra.mxu0 %v520
    %948 = vmatprep.subr.bf16.mxu0 %v517
    %949 = vmatpush1.bf16.msra.mxu0 %v516
    %950 = vmatprep.subr.bf16.mxu0 %v513
    %951 = vmatpush1.bf16.msra.mxu0 %v512
    %952 = vmatprep.subr.bf16.mxu0 %v509
    %953 = vmatpush1.bf16.msra.mxu0 %v508
    %954 = vmatprep.subr.bf16.mxu0 %v505
    %955 = vmatpush1.bf16.msra.mxu0 %v504
    %956 = vmatprep.subr.bf16.mxu0 %v501
    %957 = vmatpush1.bf16.msra.mxu0 %v500
    %958 = vmatprep.subr.bf16.mxu0 %v497
    %959 = vmatpush1.bf16.msra.mxu0 %v496
    %960 = vmatprep.subr.bf16.mxu0 0
    %961 = vmatpush2.bf16.msra.mxu0 0
    %962 = vmatprep.subr.bf16.mxu0 0
    %963 = vmatpush2.bf16.msra.mxu0 0
    %964 = vmatprep.subr.bf16.mxu0 0
    %965 = vmatpush2.bf16.msra.mxu0 0
    %966 = vmatprep.subr.bf16.mxu0 0
    %967 = vmatpush2.bf16.msra.mxu0 0
    %968 = vmatprep.subr.bf16.mxu0 0
    %969 = vmatpush2.bf16.msra.mxu0 0
    %970 = vmatprep.subr.bf16.mxu0 0
    %971 = vmatpush2.bf16.msra.mxu0 0
    %972 = vmatprep.subr.bf16.mxu0 0
    %973 = vmatpush2.bf16.msra.mxu0 0
    %974 = vmatprep.subr.bf16.mxu0 0
    %975 = vmatpush2.bf16.msra.mxu0 0
    %976 = vmatprep.mubr.bf16.mxu0 0
    %977 = vmatmul.mubr.bf16.gmra.mxu0 %v902
    %v978 = vpop.f32.mrf.mxu0
    %v979 = vadd.f32 0.0, %v978
    %v980 = vpop.f32.mrf.mxu0
    %v981 = vadd.f32 0.0, %v980
    %v982 = vpop.f32.mrf.mxu0
    %v983 = vpop.f32.mrf.mxu0
    %984 = vdwg.mxu0
    %v985 = vld [vmem:[#allocation2 + $0x60] sm:$0xff]
    %v986 = vld [vmem:[#allocation2 + $0x68] sm:$0xff]
    %v987 = vld [vmem:[#allocation2 + $0x70] sm:$0xff]
    %v988 = vld [vmem:[#allocation2 + $0x78] sm:$0xff]
    %v989 = vadd.f32 %v985, %v938
    %v990 = vadd.f32 %v986, %v940
    %v991 = vadd.f32 %v987, %v979
    %v992 = vadd.f32 %v988, %v981
    %v993 = vxor.u32 %v989, 2147483648
    %v994 = vxor.u32 %v990, 2147483648
    %v995 = vmul.f32 %v993, 1.442695
    %v996 = vpow.pop %v995
    %v997 = vmul.f32 %v994, 1.442695
    %v998 = vpow.pop %v997
    %v999 = vadd.f32 %v996, 1.0
    %v1000 = vadd.f32 %v998, 1.0
    %v1001 = vrcp.pop %v999
    %v1002 = vmul.f32 1.0, %v1001
    %v1003 = vrcp.pop %v1000
    %v1004 = vmul.f32 1.0, %v1003
    %v1005 = vtanh.pop %v991
    %v1006 = vxor.u32 %v992, 2147483648
    %v1007 = vmul.f32 %v1006, 1.442695
    %v1008 = vpow.pop %v1007
    %v1009 = vadd.f32 %v1008, 1.0
    %v1010 = vrcp.pop %v1009
    %v1011 = vmul.f32 1.0, %v1010
    %v1012 = vmul.f32 %v1004, %v899
    %v1013 = vmul.f32 %v1002, %v1005
    %v1014 = vadd.f32 %v1012, %v1013
    %v1015 = vtanh.pop %v1014
    %v1016 = vmul.f32 %v1011, %v1015
    %v1017 = vpack.c.bf16 %v1016, %v1016
    %1018 = vmatprep.subr.bf16.mxu0 %v523
    %1019 = vmatpush1.bf16.msra.mxu0 %v522
    %1020 = vmatprep.subr.bf16.mxu0 %v519
    %1021 = vmatpush1.bf16.msra.mxu0 %v518
    %1022 = vmatprep.subr.bf16.mxu0 %v515
    %1023 = vmatpush1.bf16.msra.mxu0 %v514
    %1024 = vmatprep.subr.bf16.mxu0 %v511
    %1025 = vmatpush1.bf16.msra.mxu0 %v510
    %1026 = vmatprep.subr.bf16.mxu0 %v507
    %1027 = vmatpush1.bf16.msra.mxu0 %v506
    %1028 = vmatprep.subr.bf16.mxu0 %v503
    %1029 = vmatpush1.bf16.msra.mxu0 %v502
    %1030 = vmatprep.subr.bf16.mxu0 %v499
    %1031 = vmatpush1.bf16.msra.mxu0 %v498
    %1032 = vmatprep.subr.bf16.mxu0 %v495
    %1033 = vmatpush1.bf16.msra.mxu0 %v494
    %1034 = vmatprep.subr.bf16.mxu0 0
    %1035 = vmatpush2.bf16.msra.mxu0 0
    %1036 = vmatprep.subr.bf16.mxu0 0
    %1037 = vmatpush2.bf16.msra.mxu0 0
    %1038 = vmatprep.subr.bf16.mxu0 0
    %1039 = vmatpush2.bf16.msra.mxu0 0
    %1040 = vmatprep.subr.bf16.mxu0 0
    %1041 = vmatpush2.bf16.msra.mxu0 0
    %1042 = vmatprep.subr.bf16.mxu0 0
    %1043 = vmatpush2.bf16.msra.mxu0 0
    %1044 = vmatprep.subr.bf16.mxu0 0
    %1045 = vmatpush2.bf16.msra.mxu0 0
    %1046 = vmatprep.subr.bf16.mxu0 0
    %1047 = vmatpush2.bf16.msra.mxu0 0
    %1048 = vmatprep.subr.bf16.mxu0 0
    %1049 = vmatpush2.bf16.msra.mxu0 0
    %1050 = vmatprep.mubr.bf16.mxu0 0
    %1051 = vmatmul.mubr.bf16.gmra.mxu0 %v1017
    %v1052 = vpop.f32.mrf.mxu0
    %v1053 = vadd.f32 0.0, %v1052
    %v1054 = vpop.f32.mrf.mxu0
    %v1055 = vadd.f32 0.0, %v1054
    %v1056 = vpop.f32.mrf.mxu0
    %v1057 = vpop.f32.mrf.mxu0
    %1058 = vdwg.mxu0
    %1059 = vmatprep.subr.bf16.mxu0 %v525
    %1060 = vmatpush1.bf16.msra.mxu0 %v524
    %1061 = vmatprep.subr.bf16.mxu0 %v521
    %1062 = vmatpush1.bf16.msra.mxu0 %v520
    %1063 = vmatprep.subr.bf16.mxu0 %v517
    %1064 = vmatpush1.bf16.msra.mxu0 %v516
    %1065 = vmatprep.subr.bf16.mxu0 %v513
    %1066 = vmatpush1.bf16.msra.mxu0 %v512
    %1067 = vmatprep.subr.bf16.mxu0 %v509
    %1068 = vmatpush1.bf16.msra.mxu0 %v508
    %1069 = vmatprep.subr.bf16.mxu0 %v505
    %1070 = vmatpush1.bf16.msra.mxu0 %v504
    %1071 = vmatprep.subr.bf16.mxu0 %v501
    %1072 = vmatpush1.bf16.msra.mxu0 %v500
    %1073 = vmatprep.subr.bf16.mxu0 %v497
    %1074 = vmatpush1.bf16.msra.mxu0 %v496
    %1075 = vmatprep.subr.bf16.mxu0 0
    %1076 = vmatpush2.bf16.msra.mxu0 0
    %1077 = vmatprep.subr.bf16.mxu0 0
    %1078 = vmatpush2.bf16.msra.mxu0 0
    %1079 = vmatprep.subr.bf16.mxu0 0
    %1080 = vmatpush2.bf16.msra.mxu0 0
    %1081 = vmatprep.subr.bf16.mxu0 0
    %1082 = vmatpush2.bf16.msra.mxu0 0
    %1083 = vmatprep.subr.bf16.mxu0 0
    %1084 = vmatpush2.bf16.msra.mxu0 0
    %1085 = vmatprep.subr.bf16.mxu0 0
    %1086 = vmatpush2.bf16.msra.mxu0 0
    %1087 = vmatprep.subr.bf16.mxu0 0
    %1088 = vmatpush2.bf16.msra.mxu0 0
    %1089 = vmatprep.subr.bf16.mxu0 0
    %1090 = vmatpush2.bf16.msra.mxu0 0
    %1091 = vmatprep.mubr.bf16.mxu0 0
    %1092 = vmatmul.mubr.bf16.gmra.mxu0 %v1017
    %v1093 = vpop.f32.mrf.mxu0
    %v1094 = vadd.f32 0.0, %v1093
    %v1095 = vpop.f32.mrf.mxu0
    %v1096 = vadd.f32 0.0, %v1095
    %v1097 = vpop.f32.mrf.mxu0
    %v1098 = vpop.f32.mrf.mxu0
    %1099 = vdwg.mxu0
    %v1100 = vld [vmem:[#allocation2 + $0x80] sm:$0xff]
    %v1101 = vld [vmem:[#allocation2 + $0x88] sm:$0xff]
    %v1102 = vld [vmem:[#allocation2 + $0x90] sm:$0xff]
    %v1103 = vld [vmem:[#allocation2 + $0x98] sm:$0xff]
    %v1104 = vadd.f32 %v1100, %v1053
    %v1105 = vadd.f32 %v1101, %v1055
    %v1106 = vadd.f32 %v1102, %v1094
    %v1107 = vadd.f32 %v1103, %v1096
    %v1108 = vxor.u32 %v1104, 2147483648
    %v1109 = vxor.u32 %v1105, 2147483648
    %v1110 = vmul.f32 %v1108, 1.442695
    %v1111 = vpow.pop %v1110
    %v1112 = vmul.f32 %v1109, 1.442695
    %v1113 = vpow.pop %v1112
    %v1114 = vadd.f32 %v1111, 1.0
    %v1115 = vadd.f32 %v1113, 1.0
    %v1116 = vrcp.pop %v1114
    %v1117 = vmul.f32 1.0, %v1116
    %v1118 = vrcp.pop %v1115
    %v1119 = vmul.f32 1.0, %v1118
    %v1120 = vtanh.pop %v1106
    %v1121 = vxor.u32 %v1107, 2147483648
    %v1122 = vmul.f32 %v1121, 1.442695
    %v1123 = vpow.pop %v1122
    %v1124 = vadd.f32 %v1123, 1.0
    %v1125 = vrcp.pop %v1124
    %v1126 = vmul.f32 1.0, %v1125
    %v1127 = vmul.f32 %v1119, %v1014
    %v1128 = vmul.f32 %v1117, %v1120
    %v1129 = vadd.f32 %v1127, %v1128
    %v1130 = vtanh.pop %v1129
    %v1131 = vmul.f32 %v1126, %v1130
    %v1132 = vpack.c.bf16 %v1131, %v1131
    %1133 = vmatprep.subr.bf16.mxu0 %v523
    %1134 = vmatpush1.bf16.msra.mxu0 %v522
    %1135 = vmatprep.subr.bf16.mxu0 %v519
    %1136 = vmatpush1.bf16.msra.mxu0 %v518
    %1137 = vmatprep.subr.bf16.mxu0 %v515
    %1138 = vmatpush1.bf16.msra.mxu0 %v514
    %1139 = vmatprep.subr.bf16.mxu0 %v511
    %1140 = vmatpush1.bf16.msra.mxu0 %v510
    %1141 = vmatprep.subr.bf16.mxu0 %v507
    %1142 = vmatpush1.bf16.msra.mxu0 %v506
    %1143 = vmatprep.subr.bf16.mxu0 %v503
    %1144 = vmatpush1.bf16.msra.mxu0 %v502
    %1145 = vmatprep.subr.bf16.mxu0 %v499
    %1146 = vmatpush1.bf16.msra.mxu0 %v498
    %1147 = vmatprep.subr.bf16.mxu0 %v495
    %1148 = vmatpush1.bf16.msra.mxu0 %v494
    %1149 = vmatprep.subr.bf16.mxu0 0
    %1150 = vmatpush2.bf16.msra.mxu0 0
    %1151 = vmatprep.subr.bf16.mxu0 0
    %1152 = vmatpush2.bf16.msra.mxu0 0
    %1153 = vmatprep.subr.bf16.mxu0 0
    %1154 = vmatpush2.bf16.msra.mxu0 0
    %1155 = vmatprep.subr.bf16.mxu0 0
    %1156 = vmatpush2.bf16.msra.mxu0 0
    %1157 = vmatprep.subr.bf16.mxu0 0
    %1158 = vmatpush2.bf16.msra.mxu0 0
    %1159 = vmatprep.subr.bf16.mxu0 0
    %1160 = vmatpush2.bf16.msra.mxu0 0
    %1161 = vmatprep.subr.bf16.mxu0 0
    %1162 = vmatpush2.bf16.msra.mxu0 0
    %1163 = vmatprep.subr.bf16.mxu0 0
    %1164 = vmatpush2.bf16.msra.mxu0 0
    %1165 = vmatprep.mubr.bf16.mxu0 0
    %1166 = vmatmul.mubr.bf16.gmra.mxu0 %v1132
    %v1167 = vpop.f32.mrf.mxu0
    %v1168 = vadd.f32 0.0, %v1167
    %v1169 = vpop.f32.mrf.mxu0
    %v1170 = vadd.f32 0.0, %v1169
    %v1171 = vpop.f32.mrf.mxu0
    %v1172 = vpop.f32.mrf.mxu0
    %1173 = vdwg.mxu0
    %1174 = vmatprep.subr.bf16.mxu0 %v525
    %1175 = vmatpush1.bf16.msra.mxu0 %v524
    %1176 = vmatprep.subr.bf16.mxu0 %v521
    %1177 = vmatpush1.bf16.msra.mxu0 %v520
    %1178 = vmatprep.subr.bf16.mxu0 %v517
    %1179 = vmatpush1.bf16.msra.mxu0 %v516
    %1180 = vmatprep.subr.bf16.mxu0 %v513
    %1181 = vmatpush1.bf16.msra.mxu0 %v512
    %1182 = vmatprep.subr.bf16.mxu0 %v509
    %1183 = vmatpush1.bf16.msra.mxu0 %v508
    %1184 = vmatprep.subr.bf16.mxu0 %v505
    %1185 = vmatpush1.bf16.msra.mxu0 %v504
    %1186 = vmatprep.subr.bf16.mxu0 %v501
    %1187 = vmatpush1.bf16.msra.mxu0 %v500
    %1188 = vmatprep.subr.bf16.mxu0 %v497
    %1189 = vmatpush1.bf16.msra.mxu0 %v496
    %1190 = vmatprep.subr.bf16.mxu0 0
    %1191 = vmatpush2.bf16.msra.mxu0 0
    %1192 = vmatprep.subr.bf16.mxu0 0
    %1193 = vmatpush2.bf16.msra.mxu0 0
    %1194 = vmatprep.subr.bf16.mxu0 0
    %1195 = vmatpush2.bf16.msra.mxu0 0
    %1196 = vmatprep.subr.bf16.mxu0 0
    %1197 = vmatpush2.bf16.msra.mxu0 0
    %1198 = vmatprep.subr.bf16.mxu0 0
    %1199 = vmatpush2.bf16.msra.mxu0 0
    %1200 = vmatprep.subr.bf16.mxu0 0
    %1201 = vmatpush2.bf16.msra.mxu0 0
    %1202 = vmatprep.subr.bf16.mxu0 0
    %1203 = vmatpush2.bf16.msra.mxu0 0
    %1204 = vmatprep.subr.bf16.mxu0 0
    %1205 = vmatpush2.bf16.msra.mxu0 0
    %1206 = vmatprep.mubr.bf16.mxu0 0
    %1207 = vmatmul.mubr.bf16.gmra.mxu0 %v1132
    %v1208 = vpop.f32.mrf.mxu0
    %v1209 = vadd.f32 0.0, %v1208
    %v1210 = vpop.f32.mrf.mxu0
    %v1211 = vadd.f32 0.0, %v1210
    %v1212 = vpop.f32.mrf.mxu0
    %v1213 = vpop.f32.mrf.mxu0
    %1214 = vdwg.mxu0
    %v1215 = vld [vmem:[#allocation2 + $0xa0] sm:$0xff]
    %v1216 = vld [vmem:[#allocation2 + $0xa8] sm:$0xff]
    %v1217 = vld [vmem:[#allocation2 + $0xb0] sm:$0xff]
    %v1218 = vld [vmem:[#allocation2 + $0xb8] sm:$0xff]
    %v1219 = vadd.f32 %v1215, %v1168
    %v1220 = vadd.f32 %v1216, %v1170
    %v1221 = vadd.f32 %v1217, %v1209
    %v1222 = vadd.f32 %v1218, %v1211
    %v1223 = vxor.u32 %v1219, 2147483648
    %v1224 = vxor.u32 %v1220, 2147483648
    %v1225 = vmul.f32 %v1223, 1.442695
    %v1226 = vpow.pop %v1225
    %v1227 = vmul.f32 %v1224, 1.442695
    %v1228 = vpow.pop %v1227
    %v1229 = vadd.f32 %v1226, 1.0
    %v1230 = vadd.f32 %v1228, 1.0
    %v1231 = vrcp.pop %v1229
    %v1232 = vmul.f32 1.0, %v1231
    %v1233 = vrcp.pop %v1230
    %v1234 = vmul.f32 1.0, %v1233
    %v1235 = vtanh.pop %v1221
    %v1236 = vxor.u32 %v1222, 2147483648
    %v1237 = vmul.f32 %v1236, 1.442695
    %v1238 = vpow.pop %v1237
    %v1239 = vadd.f32 %v1238, 1.0
    %v1240 = vrcp.pop %v1239
    %v1241 = vmul.f32 1.0, %v1240
    %v1242 = vmul.f32 %v1234, %v1129
    %v1243 = vmul.f32 %v1232, %v1235
    %v1244 = vadd.f32 %v1242, %v1243
    %v1245 = vtanh.pop %v1244
    %v1246 = vmul.f32 %v1241, %v1245
    %v1247 = vpack.c.bf16 %v1246, %v1246
    %1248 = vmatprep.subr.bf16.mxu0 %v523
    %1249 = vmatpush1.bf16.msra.mxu0 %v522
    %1250 = vmatprep.subr.bf16.mxu0 %v519
    %1251 = vmatpush1.bf16.msra.mxu0 %v518
    %1252 = vmatprep.subr.bf16.mxu0 %v515
    %1253 = vmatpush1.bf16.msra.mxu0 %v514
    %1254 = vmatprep.subr.bf16.mxu0 %v511
    %1255 = vmatpush1.bf16.msra.mxu0 %v510
    %1256 = vmatprep.subr.bf16.mxu0 %v507
    %1257 = vmatpush1.bf16.msra.mxu0 %v506
    %1258 = vmatprep.subr.bf16.mxu0 %v503
    %1259 = vmatpush1.bf16.msra.mxu0 %v502
    %1260 = vmatprep.subr.bf16.mxu0 %v499
    %1261 = vmatpush1.bf16.msra.mxu0 %v498
    %1262 = vmatprep.subr.bf16.mxu0 %v495
    %1263 = vmatpush1.bf16.msra.mxu0 %v494
    %1264 = vmatprep.subr.bf16.mxu0 0
    %1265 = vmatpush2.bf16.msra.mxu0 0
    %1266 = vmatprep.subr.bf16.mxu0 0
    %1267 = vmatpush2.bf16.msra.mxu0 0
    %1268 = vmatprep.subr.bf16.mxu0 0
    %1269 = vmatpush2.bf16.msra.mxu0 0
    %1270 = vmatprep.subr.bf16.mxu0 0
    %1271 = vmatpush2.bf16.msra.mxu0 0
    %1272 = vmatprep.subr.bf16.mxu0 0
    %1273 = vmatpush2.bf16.msra.mxu0 0
    %1274 = vmatprep.subr.bf16.mxu0 0
    %1275 = vmatpush2.bf16.msra.mxu0 0
    %1276 = vmatprep.subr.bf16.mxu0 0
    %1277 = vmatpush2.bf16.msra.mxu0 0
    %1278 = vmatprep.subr.bf16.mxu0 0
    %1279 = vmatpush2.bf16.msra.mxu0 0
    %1280 = vmatprep.mubr.bf16.mxu0 0
    %1281 = vmatmul.mubr.bf16.gmra.mxu0 %v1247
    %v1282 = vpop.f32.mrf.mxu0
    %v1283 = vadd.f32 0.0, %v1282
    %v1284 = vpop.f32.mrf.mxu0
    %v1285 = vadd.f32 0.0, %v1284
    %v1286 = vpop.f32.mrf.mxu0
    %v1287 = vpop.f32.mrf.mxu0
    %1288 = vdwg.mxu0
    %1289 = vmatprep.subr.bf16.mxu0 %v525
    %1290 = vmatpush1.bf16.msra.mxu0 %v524
    %1291 = vmatprep.subr.bf16.mxu0 %v521
    %1292 = vmatpush1.bf16.msra.mxu0 %v520
    %1293 = vmatprep.subr.bf16.mxu0 %v517
    %1294 = vmatpush1.bf16.msra.mxu0 %v516
    %1295 = vmatprep.subr.bf16.mxu0 %v513
    %1296 = vmatpush1.bf16.msra.mxu0 %v512
    %1297 = vmatprep.subr.bf16.mxu0 %v509
    %1298 = vmatpush1.bf16.msra.mxu0 %v508
    %1299 = vmatprep.subr.bf16.mxu0 %v505
    %1300 = vmatpush1.bf16.msra.mxu0 %v504
    %1301 = vmatprep.subr.bf16.mxu0 %v501
    %1302 = vmatpush1.bf16.msra.mxu0 %v500
    %1303 = vmatprep.subr.bf16.mxu0 %v497
    %1304 = vmatpush1.bf16.msra.mxu0 %v496
    %1305 = vmatprep.subr.bf16.mxu0 0
    %1306 = vmatpush2.bf16.msra.mxu0 0
    %1307 = vmatprep.subr.bf16.mxu0 0
    %1308 = vmatpush2.bf16.msra.mxu0 0
    %1309 = vmatprep.subr.bf16.mxu0 0
    %1310 = vmatpush2.bf16.msra.mxu0 0
    %1311 = vmatprep.subr.bf16.mxu0 0
    %1312 = vmatpush2.bf16.msra.mxu0 0
    %1313 = vmatprep.subr.bf16.mxu0 0
    %1314 = vmatpush2.bf16.msra.mxu0 0
    %1315 = vmatprep.subr.bf16.mxu0 0
    %1316 = vmatpush2.bf16.msra.mxu0 0
    %1317 = vmatprep.subr.bf16.mxu0 0
    %1318 = vmatpush2.bf16.msra.mxu0 0
    %1319 = vmatprep.subr.bf16.mxu0 0
    %1320 = vmatpush2.bf16.msra.mxu0 0
    %1321 = vmatprep.mubr.bf16.mxu0 0
    %1322 = vmatmul.mubr.bf16.gmra.mxu0 %v1247
    %v1323 = vpop.f32.mrf.mxu0
    %v1324 = vadd.f32 0.0, %v1323
    %v1325 = vpop.f32.mrf.mxu0
    %v1326 = vadd.f32 0.0, %v1325
    %v1327 = vpop.f32.mrf.mxu0
    %v1328 = vpop.f32.mrf.mxu0
    %1329 = vdwg.mxu0
    %v1330 = vld [vmem:[#allocation2 + $0xc0] sm:$0xff]
    %v1331 = vld [vmem:[#allocation2 + $0xc8] sm:$0xff]
    %v1332 = vld [vmem:[#allocation2 + $0xd0] sm:$0xff]
    %v1333 = vld [vmem:[#allocation2 + $0xd8] sm:$0xff]
    %v1334 = vadd.f32 %v1330, %v1283
    %v1335 = vadd.f32 %v1331, %v1285
    %v1336 = vadd.f32 %v1332, %v1324
    %v1337 = vadd.f32 %v1333, %v1326
    %v1338 = vxor.u32 %v1334, 2147483648
    %v1339 = vxor.u32 %v1335, 2147483648
    %v1340 = vmul.f32 %v1338, 1.442695
    %v1341 = vpow.pop %v1340
    %v1342 = vmul.f32 %v1339, 1.442695
    %v1343 = vpow.pop %v1342
    %v1344 = vadd.f32 %v1341, 1.0
    %v1345 = vadd.f32 %v1343, 1.0
    %v1346 = vrcp.pop %v1344
    %v1347 = vmul.f32 1.0, %v1346
    %v1348 = vrcp.pop %v1345
    %v1349 = vmul.f32 1.0, %v1348
    %v1350 = vtanh.pop %v1336
    %v1351 = vxor.u32 %v1337, 2147483648
    %v1352 = vmul.f32 %v1351, 1.442695
    %v1353 = vpow.pop %v1352
    %v1354 = vadd.f32 %v1353, 1.0
    %v1355 = vrcp.pop %v1354
    %v1356 = vmul.f32 1.0, %v1355
    %v1357 = vmul.f32 %v1349, %v1244
    %v1358 = vmul.f32 %v1347, %v1350
    %v1359 = vadd.f32 %v1357, %v1358
    %v1360 = vtanh.pop %v1359
    %v1361 = vmul.f32 %v1356, %v1360
    %v1362 = vpack.c.bf16 %v1361, %v1361
    %1363 = vmatprep.subr.bf16.mxu0 %v523
    %1364 = vmatpush1.bf16.msra.mxu0 %v522
    %1365 = vmatprep.subr.bf16.mxu0 %v519
    %1366 = vmatpush1.bf16.msra.mxu0 %v518
    %1367 = vmatprep.subr.bf16.mxu0 %v515
    %1368 = vmatpush1.bf16.msra.mxu0 %v514
    %1369 = vmatprep.subr.bf16.mxu0 %v511
    %1370 = vmatpush1.bf16.msra.mxu0 %v510
    %1371 = vmatprep.subr.bf16.mxu0 %v507
    %1372 = vmatpush1.bf16.msra.mxu0 %v506
    %1373 = vmatprep.subr.bf16.mxu0 %v503
    %1374 = vmatpush1.bf16.msra.mxu0 %v502
    %1375 = vmatprep.subr.bf16.mxu0 %v499
    %1376 = vmatpush1.bf16.msra.mxu0 %v498
    %1377 = vmatprep.subr.bf16.mxu0 %v495
    %1378 = vmatpush1.bf16.msra.mxu0 %v494
    %1379 = vmatprep.subr.bf16.mxu0 0
    %1380 = vmatpush2.bf16.msra.mxu0 0
    %1381 = vmatprep.subr.bf16.mxu0 0
    %1382 = vmatpush2.bf16.msra.mxu0 0
    %1383 = vmatprep.subr.bf16.mxu0 0
    %1384 = vmatpush2.bf16.msra.mxu0 0
    %1385 = vmatprep.subr.bf16.mxu0 0
    %1386 = vmatpush2.bf16.msra.mxu0 0
    %1387 = vmatprep.subr.bf16.mxu0 0
    %1388 = vmatpush2.bf16.msra.mxu0 0
    %1389 = vmatprep.subr.bf16.mxu0 0
    %1390 = vmatpush2.bf16.msra.mxu0 0
    %1391 = vmatprep.subr.bf16.mxu0 0
    %1392 = vmatpush2.bf16.msra.mxu0 0
    %1393 = vmatprep.subr.bf16.mxu0 0
    %1394 = vmatpush2.bf16.msra.mxu0 0
    %1395 = vmatprep.mubr.bf16.mxu0 0
    %1396 = vmatmul.mubr.bf16.gmra.mxu0 %v1362
    %v1397 = vpop.f32.mrf.mxu0
    %v1398 = vadd.f32 0.0, %v1397
    %v1399 = vpop.f32.mrf.mxu0
    %v1400 = vadd.f32 0.0, %v1399
    %v1401 = vpop.f32.mrf.mxu0
    %v1402 = vpop.f32.mrf.mxu0
    %1403 = vdwg.mxu0
    %1404 = vmatprep.subr.bf16.mxu0 %v525
    %1405 = vmatpush1.bf16.msra.mxu0 %v524
    %1406 = vmatprep.subr.bf16.mxu0 %v521
    %1407 = vmatpush1.bf16.msra.mxu0 %v520
    %1408 = vmatprep.subr.bf16.mxu0 %v517
    %1409 = vmatpush1.bf16.msra.mxu0 %v516
    %1410 = vmatprep.subr.bf16.mxu0 %v513
    %1411 = vmatpush1.bf16.msra.mxu0 %v512
    %1412 = vmatprep.subr.bf16.mxu0 %v509
    %1413 = vmatpush1.bf16.msra.mxu0 %v508
    %1414 = vmatprep.subr.bf16.mxu0 %v505
    %1415 = vmatpush1.bf16.msra.mxu0 %v504
    %1416 = vmatprep.subr.bf16.mxu0 %v501
    %1417 = vmatpush1.bf16.msra.mxu0 %v500
    %1418 = vmatprep.subr.bf16.mxu0 %v497
    %1419 = vmatpush1.bf16.msra.mxu0 %v496
    %1420 = vmatprep.subr.bf16.mxu0 0
    %1421 = vmatpush2.bf16.msra.mxu0 0
    %1422 = vmatprep.subr.bf16.mxu0 0
    %1423 = vmatpush2.bf16.msra.mxu0 0
    %1424 = vmatprep.subr.bf16.mxu0 0
    %1425 = vmatpush2.bf16.msra.mxu0 0
    %1426 = vmatprep.subr.bf16.mxu0 0
    %1427 = vmatpush2.bf16.msra.mxu0 0
    %1428 = vmatprep.subr.bf16.mxu0 0
    %1429 = vmatpush2.bf16.msra.mxu0 0
    %1430 = vmatprep.subr.bf16.mxu0 0
    %1431 = vmatpush2.bf16.msra.mxu0 0
    %1432 = vmatprep.subr.bf16.mxu0 0
    %1433 = vmatpush2.bf16.msra.mxu0 0
    %1434 = vmatprep.subr.bf16.mxu0 0
    %1435 = vmatpush2.bf16.msra.mxu0 0
    %1436 = vmatprep.mubr.bf16.mxu0 0
    %1437 = vmatmul.mubr.bf16.gmra.mxu0 %v1362
    %v1438 = vpop.f32.mrf.mxu0
    %v1439 = vadd.f32 0.0, %v1438
    %v1440 = vpop.f32.mrf.mxu0
    %v1441 = vadd.f32 0.0, %v1440
    %v1442 = vpop.f32.mrf.mxu0
    %v1443 = vpop.f32.mrf.mxu0
    %1444 = vdwg.mxu0
    %v1445 = vld [vmem:[#allocation2 + $0xe0] sm:$0xff]
    %v1446 = vld [vmem:[#allocation2 + $0xe8] sm:$0xff]
    %v1447 = vld [vmem:[#allocation2 + $0xf0] sm:$0xff]
    %v1448 = vld [vmem:[#allocation2 + $0xf8] sm:$0xff]
    %v1449 = vadd.f32 %v1445, %v1398
    %v1450 = vadd.f32 %v1446, %v1400
    %v1451 = vadd.f32 %v1447, %v1439
    %v1452 = vadd.f32 %v1448, %v1441
    %v1453 = vxor.u32 %v1449, 2147483648
    %v1454 = vxor.u32 %v1450, 2147483648
    %v1455 = vmul.f32 %v1453, 1.442695
    %v1456 = vpow.pop %v1455
    %v1457 = vmul.f32 %v1454, 1.442695
    %v1458 = vpow.pop %v1457
    %v1459 = vadd.f32 %v1456, 1.0
    %v1460 = vadd.f32 %v1458, 1.0
    %v1461 = vrcp.pop %v1459
    %v1462 = vmul.f32 1.0, %v1461
    %v1463 = vrcp.pop %v1460
    %v1464 = vmul.f32 1.0, %v1463
    %v1465 = vtanh.pop %v1451
    %v1466 = vxor.u32 %v1452, 2147483648
    %v1467 = vmul.f32 %v1466, 1.442695
    %v1468 = vpow.pop %v1467
    %v1469 = vadd.f32 %v1468, 1.0
    %v1470 = vrcp.pop %v1469
    %v1471 = vmul.f32 1.0, %v1470
    %v1472 = vmul.f32 %v1464, %v1359
    %v1473 = vmul.f32 %v1462, %v1465
    %v1474 = vadd.f32 %v1472, %v1473
    %v1475 = vtanh.pop %v1474
    %v1476 = vmul.f32 %v1471, %v1475
    %v1477 = vld [vmem:[%s4] sm:$0xff]
    %v1478 = vld [vmem:[%s4 + $0x8] sm:$0xff]
    %v1479 = vld [vmem:[%s4 + $0x10] sm:$0xff]
    %v1480 = vld [vmem:[%s4 + $0x18] sm:$0xff]
    %v1481 = vld [vmem:[%s4 + $0x20] sm:$0xff]
    %v1482 = vld [vmem:[%s4 + $0x28] sm:$0xff]
    %v1483 = vld [vmem:[%s4 + $0x30] sm:$0xff]
    %v1484 = vld [vmem:[%s4 + $0x38] sm:$0xff]
    %v1485 = vld [vmem:[%s4 + $0x40] sm:$0xff]
    %v1486 = vld [vmem:[%s4 + $0x48] sm:$0xff]
    %v1487 = vld [vmem:[%s4 + $0x50] sm:$0xff]
    %v1488 = vld [vmem:[%s4 + $0x58] sm:$0xff]
    %v1489 = vld [vmem:[%s4 + $0x60] sm:$0xff]
    %v1490 = vld [vmem:[%s4 + $0x68] sm:$0xff]
    %v1491 = vld [vmem:[%s4 + $0x70] sm:$0xff]
    %v1492 = vld [vmem:[%s4 + $0x78] sm:$0xff]
    %v1493 = vld [vmem:[%s5] sm:$0x1]
    %v1495 = vlaneseq
    %v1496 = vshrl.u32 %v1495, 7
    %v1497 = vsub.s32 0, %v1496
    %v1498 = vrot.slane %v1493, %v1497
    %1500 = vmatprep.subr.mxu0 0.0
    %1501 = vmatpush1.msra.mxu0 %v1492
    %1502 = vmatprep.subr.mxu0 0.0
    %1503 = vmatpush1.msra.mxu0 %v1491
    %1504 = vmatprep.subr.mxu0 0.0
    %1505 = vmatpush1.msra.mxu0 %v1490
    %1506 = vmatprep.subr.mxu0 0.0
    %1507 = vmatpush1.msra.mxu0 %v1489
    %1508 = vmatprep.subr.mxu0 0.0
    %1509 = vmatpush1.msra.mxu0 %v1488
    %1510 = vmatprep.subr.mxu0 0.0
    %1511 = vmatpush1.msra.mxu0 %v1487
    %1512 = vmatprep.subr.mxu0 0.0
    %1513 = vmatpush1.msra.mxu0 %v1486
    %1514 = vmatprep.subr.mxu0 0.0
    %1515 = vmatpush1.msra.mxu0 %v1485
    %1516 = vmatprep.subr.mxu0 0.0
    %1517 = vmatpush1.msra.mxu0 %v1484
    %1518 = vmatprep.subr.mxu0 0.0
    %1519 = vmatpush1.msra.mxu0 %v1483
    %1520 = vmatprep.subr.mxu0 0.0
    %1521 = vmatpush1.msra.mxu0 %v1482
    %1522 = vmatprep.subr.mxu0 0.0
    %1523 = vmatpush1.msra.mxu0 %v1481
    %1524 = vmatprep.subr.mxu0 0.0
    %1525 = vmatpush1.msra.mxu0 %v1480
    %1526 = vmatprep.subr.mxu0 0.0
    %1527 = vmatpush1.msra.mxu0 %v1479
    %1528 = vmatprep.subr.mxu0 0.0
    %1529 = vmatpush1.msra.mxu0 %v1478
    %1530 = vmatprep.subr.mxu0 0.0
    %1531 = vmatpush1.msra.mxu0 %v1477
    %1532 = vmatprep.subr.mxu0 0.0
    %1533 = vmatpush2.msra.mxu0 0.0
    %1534 = vmatprep.subr.mxu0 0.0
    %1535 = vmatpush2.msra.mxu0 0.0
    %1536 = vmatprep.subr.mxu0 0.0
    %1537 = vmatpush2.msra.mxu0 0.0
    %1538 = vmatprep.subr.mxu0 0.0
    %1539 = vmatpush2.msra.mxu0 0.0
    %1540 = vmatprep.subr.mxu0 0.0
    %1541 = vmatpush2.msra.mxu0 0.0
    %1542 = vmatprep.subr.mxu0 0.0
    %1543 = vmatpush2.msra.mxu0 0.0
    %1544 = vmatprep.subr.mxu0 0.0
    %1545 = vmatpush2.msra.mxu0 0.0
    %1546 = vmatprep.subr.mxu0 0.0
    %1547 = vmatpush2.msra.mxu0 0.0
    %1548 = vmatprep.subr.mxu0 0.0
    %1549 = vmatpush2.msra.mxu0 0.0
    %1550 = vmatprep.subr.mxu0 0.0
    %1551 = vmatpush2.msra.mxu0 0.0
    %1552 = vmatprep.subr.mxu0 0.0
    %1553 = vmatpush2.msra.mxu0 0.0
    %1554 = vmatprep.subr.mxu0 0.0
    %1555 = vmatpush2.msra.mxu0 0.0
    %1556 = vmatprep.subr.mxu0 0.0
    %1557 = vmatpush2.msra.mxu0 0.0
    %1558 = vmatprep.subr.mxu0 0.0
    %1559 = vmatpush2.msra.mxu0 0.0
    %1560 = vmatprep.subr.mxu0 0.0
    %1561 = vmatpush2.msra.mxu0 0.0
    %1562 = vmatprep.subr.mxu0 0.0
    %1563 = vmatpush2.msra.mxu0 0.0
    %1564 = vmatprep.mubr.f32.mxu0 0.0
    %1565 = vmatmul.mubr.f32.gmra.mxu0 %v1476
    %v1566 = vpop.f32.mrf.mxu0
    %v1567 = vadd.f32 %v1498, %v1566
    %v1568 = vpop.f32.mrf.mxu0
    %1569 = vdwg.mxu0
    %vm1570 = vcmask 23552
    %1571 = vst.msk [vmem:[%s6] sm:$0xff] %vm1570, %v1567
    // Predicated region
    $region30: #{predictor_forward.1} parent=1 // pred_check
      _
    $region31: #{predictor_forward.1} parent=1 // pred_check_branch
      %1573 = sbr.rel (0) target = $region33
    $region32: #{predictor_forward.1} parent=1 // pred_region
      _
    $region33: #{predictor_forward.1} parent=1 // pred_fallthru
      _
    // Predicated region
    $region34: #{predictor_forward.1} parent=1 // pred_check
      _
    $region35: #{predictor_forward.1} parent=1 // pred_check_branch
      %1575 = sbr.rel (0) target = $region37
    $region36: #{predictor_forward.1} parent=1 // pred_region
      _
    $region37: #{predictor_forward.1} parent=1 // pred_fallthru
      _
    %1576 = vsyncpa [#allocation4], 1

</llo_original>
